<compile_context>
chip_gen: v7x
topology: tpu7x:2x2x1
jax: 0.10.0
libtpu: 0.0.40
codegen_flags: <defaults>
</compile_context>

<pallas_src>
import functools
from typing import List

import jax
import jax.numpy as jnp
import numpy as np
from jax.experimental import pallas as pl
from jax.experimental.pallas import tpu as pltpu


def _round_up(x: int, m: int) -> int:
    return (x + m - 1) // m * m


# ----------------------------- slice logic (pure Python, same as PyTorch) ---

def get_tomato_slice(idx: int) -> List[int]:
    if idx == 0:
        return [0, 1, 2, 3, 463, 464, 465]
    return [
        4 + (idx - 1) * 3, 4 + (idx - 1) * 3 + 1, 4 + (idx - 1) * 3 + 2,
        157 + (idx - 1) * 6, 157 + (idx - 1) * 6 + 1, 157 + (idx - 1) * 6 + 2,
        157 + (idx - 1) * 6 + 3, 157 + (idx - 1) * 6 + 4, 157 + (idx - 1) * 6 + 5,
        463 + idx * 3, 463 + idx * 3 + 1, 463 + idx * 3 + 2,
    ]


def get_part_slice(idx_list, func) -> List[int]:
    result = []
    for idx in idx_list:
        result.extend(func(idx))
    return result


def build_part_slices():
    f = get_tomato_slice
    return [
        ("root", get_part_slice([0], f)),
        ("head", get_part_slice([12, 15], f)),
        ("stem", get_part_slice([3, 6, 9], f)),
        ("larm", get_part_slice([14, 17, 19, 21], f)),
        ("rarm", get_part_slice([13, 16, 18, 20], f)),
        ("lleg", get_part_slice([2, 5, 8, 11], f)),
        ("rleg", get_part_slice([1, 4, 7, 10], f)),
        ("lhnd", get_part_slice(range(22, 37), f)),
        ("rhnd", get_part_slice(range(37, 52), f)),
        ("face", list(range(619, 669))),
    ]


# ----------------------------- Pallas kernel --------------------------------

def _decoder_kernel(x_ref, w_ref, b_ref, o_ref):
    # x_ref: (tm, K)   w_ref: (K, 669)   b_ref: (1, 669) f32   o_ref: (tm, 669)
    acc = jnp.dot(x_ref[...], w_ref[...], preferred_element_type=jnp.float32)
    o_ref[...] = (acc + b_ref[...]).astype(o_ref.dtype)


@functools.partial(jax.jit, static_argnames=("tm", "compute_dtype"))
def single_pose_decode(motion, w_full, b_full, *, tm=512, compute_dtype=None):
    """motion: (B, T, 10*D); returns (B, T, 669) in motion's dtype."""
    B, T, K = motion.shape
    OUT = w_full.shape[1]            # 669 (un-padded; no wrapper slice needed)
    M = B * T

    x = motion.reshape(M, K)
    out_dtype = motion.dtype
    if compute_dtype is not None:
        x = x.astype(compute_dtype)
        w_full = w_full.astype(compute_dtype)

    itemsize = jnp.dtype(x.dtype).itemsize
    sub = {4: 8, 2: 16, 1: 32}[itemsize]   # dtype-dependent sublane multiple

    # Row tile: as big as requested, but (a) a multiple of the sublane count so
    # a ragged last block stays legal (Pallas masks out-of-range rows on
    # writeback), and (b) capped at ceil(M/2) so small-M calls still give the
    # "parallel" grid >= 2 steps -> both v7x TensorCores can run.
    tm_cap = _round_up(pl.cdiv(M, 2), sub) if M > sub else sub
    tm_eff = max(min(tm, tm_cap), sub)
    grid = pl.cdiv(M, tm_eff)

    out_bytes = jnp.dtype(out_dtype).itemsize
    cost = pl.CostEstimate(
        flops=2 * M * K * OUT,
        transcendentals=0,
        bytes_accessed=(M * K + K * OUT) * itemsize + OUT * 4 + M * OUT * out_bytes,
    )

    out = pl.pallas_call(
        _decoder_kernel,
        out_shape=jax.ShapeDtypeStruct((M, OUT), out_dtype),
        grid_spec=pltpu.PrefetchScalarGridSpec(
            num_scalar_prefetch=0,
            grid=(grid,),
            in_specs=[
                pl.BlockSpec((tm_eff, K), lambda i: (i, 0)),
                # Weight / bias: constant block index -> fetched once, stay
                # resident in VMEM across the whole grid.
                pl.BlockSpec((K, OUT), lambda i: (0, 0)),
                pl.BlockSpec((1, OUT), lambda i: (0, 0)),
            ],
            out_specs=pl.BlockSpec((tm_eff, OUT), lambda i: (i, 0)),
        ),
        compiler_params=pltpu.CompilerParams(
            dimension_semantics=("parallel",),
        ),
        cost_estimate=cost,
    )(x, w_full, b_full.reshape(1, OUT))

    return out.reshape(B, T, OUT)


# ----------------------------- parameter construction -----------------------

def init_params(key, latent_dim=64, output_dim=669):
    """Build per-part Linear weights deterministically and fuse them into a
    single (10*latent_dim, output_dim) weight + (output_dim,) bias."""
    parts = build_part_slices()
    D = latent_dim

    # Correctness of the fusion: each output column must be written by at most
    # one part slice (otherwise the fused matmul would SUM contributions where
    # the PyTorch scatter takes the last write).
    all_idx = []
    for _, sl in parts:
        all_idx.extend(sl)
    assert len(all_idx) == len(set(all_idx)), "overlapping part slices"
    assert max(all_idx) < output_dim and min(all_idx) >= 0
    # Columns covered by no part stay 0 (matches torch.zeros init of output).

    w_full = np.zeros((10 * D, output_dim), dtype=np.float32)
    b_full = np.zeros((output_dim,), dtype=np.float32)
    part_params = []  # keep originals for the reference check

    keys = jax.random.split(key, 2 * len(parts))
    for p, (name, sl) in enumerate(parts):
        out_p = len(sl)
        bound = 1.0 / np.sqrt(D)  # nn.Linear default-style uniform init
        W_p = np.asarray(jax.random.uniform(keys[2 * p], (out_p, D),
                                            minval=-bound, maxval=bound,
                                            dtype=jnp.float32))
        b_p = np.asarray(jax.random.uniform(keys[2 * p + 1], (out_p,),
                                            minval=-bound, maxval=bound,
                                            dtype=jnp.float32))
        idx = np.asarray(sl, dtype=np.int64)
        # y = x @ W_p.T + b_p  scattered into columns `sl` of the output
        w_full[p * D:(p + 1) * D, idx] = W_p.T
        b_full[idx] = b_p
        part_params.append((name, sl, W_p, b_p))

    return jnp.asarray(w_full), jnp.asarray(b_full), part_params


def reference_forward(motion, part_params, latent_dim=64, output_dim=669):
    """Pure-numpy re-implementation of the PyTorch forward (slice + scatter)."""
    motion = np.asarray(motion)
    B, T, _ = motion.shape
    D = latent_dim
    out = np.zeros((B, T, output_dim), dtype=motion.dtype)
    for p, (name, sl, W_p, b_p) in enumerate(part_params):
        feat = motion[:, :, p * D:(p + 1) * D] @ W_p.T + b_p
        out[:, :, np.asarray(sl)] = feat
    return out


# ----------------------------- main ------------------------------------------

if __name__ == "__main__":
    latent_dim = 64
    output_dim = 669
    B, T = 2, 8

    key = jax.random.PRNGKey(0)
    k_params, k_x = jax.random.split(key)

    w_full, b_full, part_params = init_params(k_params, latent_dim, output_dim)
    motion = jax.random.normal(k_x, (B, T, 10 * latent_dim), dtype=jnp.float32)

    ref = reference_forward(motion, part_params, latent_dim, output_dim)

    # Exact f32 path (default): matches the PyTorch forward to 1e-5.
    out = jax.block_until_ready(single_pose_decode(motion, w_full, b_full))
    np.testing.assert_allclose(np.asarray(out), ref, rtol=1e-5, atol=1e-5)

    # Optional fast path: bf16 operands, f32 accumulate/epilogue, f32 output.
    out_bf16 = jax.block_until_ready(
        single_pose_decode(motion, w_full, b_full, compute_dtype=jnp.bfloat16))
    np.testing.assert_allclose(np.asarray(out_bf16), ref, rtol=5e-2, atol=5e-2)

    print("KERNEL_OK")
</pallas_src>

<mosaic_0001>
module attributes {stable_mosaic.version = 11 : i64} {
  func.func @_decoder_kernel(%arg0: i32, %arg1: memref<8x640xf32, #tpu.memory_space<vmem>>, %arg2: memref<640x669xf32, #tpu.memory_space<vmem>>, %arg3: memref<1x669xf32, #tpu.memory_space<vmem>>, %arg4: memref<8x669xf32, #tpu.memory_space<vmem>>) attributes {dimension_semantics = [#tpu.dimension_semantics<parallel>], iteration_bounds = array<i64: 2>, scalar_prefetch = 0 : i64, scratch_operands = 0 : i64, tpu.core_type = #tpu.core_type<tc>, window_params = [{transform_indices = @transform_0, window_bounds = array<i64: 8, 640>}, {pipeline_mode = #tpu.pipeline_mode<synchronous>, transform_indices = @transform_1, window_bounds = array<i64: 640, 669>}, {pipeline_mode = #tpu.pipeline_mode<synchronous>, transform_indices = @transform_2, window_bounds = array<i64: 1, 669>}, {transform_indices = @transform_3, window_bounds = array<i64: 8, 669>}]} {
    %c0 = arith.constant 0 : index
    %c0_0 = arith.constant 0 : index
    %0 = vector.load %arg1[%c0, %c0_0] : memref<8x640xf32, #tpu.memory_space<vmem>>, vector<8x640xf32>
    %c0_1 = arith.constant 0 : index
    %c0_2 = arith.constant 0 : index
    %1 = vector.load %arg2[%c0_1, %c0_2] : memref<640x669xf32, #tpu.memory_space<vmem>>, vector<640x669xf32>
    %cst = arith.constant dense<0.000000e+00> : vector<8x669xf32>
    %2 = tpu.matmul %0, %1, %cst {dimension_numbers = #tpu.dot_dimension_numbers<[1], [0], [0], [1], [0, 0, 1, 1], [], []>} : vector<8x640xf32>, vector<640x669xf32>, vector<8x669xf32> -> vector<8x669xf32>
    %c0_3 = arith.constant 0 : index
    %c0_4 = arith.constant 0 : index
    %3 = vector.load %arg3[%c0_3, %c0_4] : memref<1x669xf32, #tpu.memory_space<vmem>>, vector<1x669xf32>
    %4 = vector.broadcast %3 : vector<1x669xf32> to vector<8x669xf32>
    %5 = arith.addf %2, %4 : vector<8x669xf32>
    %c0_5 = arith.constant 0 : index
    %c0_6 = arith.constant 0 : index
    %6 = vector.load %arg4[%c0_5, %c0_6] : memref<8x669xf32, #tpu.memory_space<vmem>>, vector<8x669xf32>
    tpu.vector_store %arg4[%c0_5, %c0_6], %5 {strides = array<i32>} : memref<8x669xf32, #tpu.memory_space<vmem>>, vector<8x669xf32>,
    return
  }
  func.func @transform_0(%arg0: i32) -> (i32, i32) {
    %c0_i32 = arith.constant 0 : i32
    %c0_i32_0 = arith.constant 0 : i32
    return %arg0, %c0_i32 : i32, i32
  }
  func.func @transform_1(%arg0: i32) -> (i32, i32) {
    %c0_i32 = arith.constant 0 : i32
    %c0_i32_0 = arith.constant 0 : i32
    %c0_i32_1 = arith.constant 0 : i32
    return %c0_i32, %c0_i32_0 : i32, i32
  }
  func.func @transform_2(%arg0: i32) -> (i32, i32) {
    %c0_i32 = arith.constant 0 : i32
    %c0_i32_0 = arith.constant 0 : i32
    %c0_i32_1 = arith.constant 0 : i32
    return %c0_i32, %c0_i32_0 : i32, i32
  }
  func.func @transform_3(%arg0: i32) -> (i32, i32) {
    %c0_i32 = arith.constant 0 : i32
    %c0_i32_0 = arith.constant 0 : i32
    return %arg0, %c0_i32 : i32, i32
  }
}

</mosaic_0001>

<llo_original>
// kernel: single_pose_decode.1
$region0: #{single_pose_decode.1}
  #allocation0 [shape = 'u32[]', space=smem, size = 0x4, offset = 0x4, fixed_abs, tag = 'smem constant byte address 0x4 - core index']
  #allocation1 [shape = 'u32[144,128]{1,0:T(1,128)}', space=vmem, size = 0x12000, scoped, tag = 'internal scratch']
  %s0 = inlined_call_operand.vmem [shape: f32[16,640], index: 0, kind: input, shape index: {}]
  %s1 = inlined_call_operand.vmem [shape: f32[640,669], index: 1, kind: input, shape index: {}]
  %s2 = inlined_call_operand.vmem [shape: f32[1,669], index: 2, kind: input, shape index: {}]
  %s3 = inlined_call_operand.hbm [shape: f32[16,669], index: 3, kind: output, shape index: {}]
  %s4 = sld [smem:[#allocation0]]
  $region45: #{single_pose_decode.1} parent=0
    _
  %s6 = ssub.s32 1, %s4
  %s7 = scalar_select 0, %s6, %s4
  $region1: #{single_pose_decode.1} parent=0
    #allocation2 [shape = 'u8[49152]{0}', space=vmem, size = 0xc000, scoped, tag = 'output window, operand 0']
    #allocation3 [shape = 's32[2]{0}', space=sflag, size = 0x8, scoped, tag = 'scoped memory for single_pose_decode.1']
    %8 = vsyncpa [#allocation3], 0
    %s9 = scalar_lea.sflag [#allocation3], 1
    %10 = vsyncpa %s9, 0
    loop: start=0, step=1, limit=4
    $region2: #{single_pose_decode.1} parent=1 // loop_pre_header
      _
    $region3: #{single_pose_decode.1} parent=1 // loop_header
      %s12 = sphi 0, %s16
      %p13 = scmp.ge.s32.totalorder %s12, 4
      %s22 = sphi 0, %s24
      %s25 = sphi 0, %s22
      %s26 = sphi 0, %s25
      %s42 = sphi 0, %s26
      %s46 = sphi 0, %s46
      %s48 = sphi 0, %s46
      %s49 = sphi 0, %s48
      %s63 = sphi 0, %s49
      %s67 = sphi 0, %s67
      %s69 = sphi 0, %s67
      %s70 = sphi 0, %s69
      %s84 = sphi 0, %s70
      %s90 = sphi 0, %s92
      %s93 = sphi 0, %s90
      %s94 = sphi 0, %s93
      %s110 = sphi 0, %s94
    $region4: #{single_pose_decode.1} parent=1 // loop_header_branch
      %15 = sbr.rel (%p13) target = $region8
    $region5: #{single_pose_decode.1} parent=1 // loop_body
      %s17 = ssub.s32 %s12, 1
      %s18 = ssub.s32 %s12, 2
      %s19 = sadd.s32 %s12, 1
      %s20 = ssub.s32 %s12, %s19
      %p21 = scmp.eq.s32.totalorder %s20, 0
      %s23 = sadd.s32 %s22, 1
      %s24 = scalar_select %p21, %s22, %s23
      %p27 = pneg %p21
      %p28 = scmp.eq.s32.totalorder %s12, 1
      %p29 = por %p27, %p28
      %p30 = scmp.ne.s32.totalorder %s22, %s25
      %p31 = scmp.eq.s32.totalorder %s12, 0
      %p32 = por %p30, %p31
      %p33 = scmp.ne.s32.totalorder %s22, %s25
      %p34 = scmp.eq.s32.totalorder %s17, 1
      %p35 = por %p33, %p34
      %p36 = scmp.ne.s32.totalorder %s25, %s26
      %p37 = scmp.eq.s32.totalorder %s17, 0
      %p38 = por %p36, %p37
      %p39 = scmp.ne.s32.totalorder %s25, %s26
      %p40 = scmp.eq.s32.totalorder %s18, 1
      %p41 = por %p39, %p40
      %p43 = scmp.ne.s32.totalorder %s26, %s42
      %p44 = scmp.eq.s32.totalorder %s18, 0
      %p45 = por %p43, %p44
      %s47 = sadd.s32 %s46, 1
      %p50 = scmp.eq.s32.totalorder %s12, 1
      %p51 = scmp.ne.s32.totalorder %s46, %s48
      %p52 = scmp.eq.s32.totalorder %s12, 0
      %p53 = por %p51, %p52
      %p54 = scmp.ne.s32.totalorder %s46, %s48
      %p55 = scmp.eq.s32.totalorder %s17, 1
      %p56 = por %p54, %p55
      %p57 = scmp.ne.s32.totalorder %s48, %s49
      %p58 = scmp.eq.s32.totalorder %s17, 0
      %p59 = por %p57, %p58
      %p60 = scmp.ne.s32.totalorder %s48, %s49
      %p61 = scmp.eq.s32.totalorder %s18, 1
      %p62 = por %p60, %p61
      %p64 = scmp.ne.s32.totalorder %s49, %s63
      %p65 = scmp.eq.s32.totalorder %s18, 0
      %p66 = por %p64, %p65
      %s68 = sadd.s32 %s67, 1
      %p71 = scmp.eq.s32.totalorder %s12, 1
      %p72 = scmp.ne.s32.totalorder %s67, %s69
      %p73 = scmp.eq.s32.totalorder %s12, 0
      %p74 = por %p72, %p73
      %p75 = scmp.ne.s32.totalorder %s67, %s69
      %p76 = scmp.eq.s32.totalorder %s17, 1
      %p77 = por %p75, %p76
      %p78 = scmp.ne.s32.totalorder %s69, %s70
      %p79 = scmp.eq.s32.totalorder %s17, 0
      %p80 = por %p78, %p79
      %p81 = scmp.ne.s32.totalorder %s69, %s70
      %p82 = scmp.eq.s32.totalorder %s18, 1
      %p83 = por %p81, %p82
      %p85 = scmp.ne.s32.totalorder %s70, %s84
      %p86 = scmp.eq.s32.totalorder %s18, 0
      %p87 = por %p85, %p86
      %s88 = ssub.s32 %s12, %s19
      %p89 = scmp.eq.s32.totalorder %s88, 0
      %s91 = sadd.s32 %s90, 1
      %s92 = scalar_select %p89, %s90, %s91
      %p95 = pneg %p89
      %p96 = scmp.eq.s32.totalorder %s12, 1
      %p97 = por %p95, %p96
      %p98 = scmp.ne.s32.totalorder %s90, %s93
      %p99 = scmp.eq.s32.totalorder %s12, 0
      %p100 = por %p98, %p99
      %p101 = scmp.ne.s32.totalorder %s90, %s93
      %p102 = scmp.eq.s32.totalorder %s17, 1
      %p103 = por %p101, %p102
      %p104 = scmp.ne.s32.totalorder %s93, %s94
      %p105 = scmp.eq.s32.totalorder %s17, 0
      %p106 = por %p104, %p105
      %p107 = scmp.ne.s32.totalorder %s93, %s94
      %p108 = scmp.eq.s32.totalorder %s18, 1
      %p109 = por %p107, %p108
      %p111 = scmp.ne.s32.totalorder %s94, %s110
      %p112 = scmp.eq.s32.totalorder %s18, 0
      %p113 = por %p111, %p112
      %p114 = scmp.le.s32.totalorder 1, %s12
      %p115 = scmp.lt.s32.totalorder %s12, 3
      %p116 = pnand %p114, %p115
      %p117 = pneg %p116
      // Predicated region
      $region9: #{single_pose_decode.1} parent=5 // pred_check
        _
      $region10: #{single_pose_decode.1} parent=5 // pred_check_branch
        %119 = sbr.rel (%p116) target = $region12
      $region11: #{single_pose_decode.1} parent=5 // pred_region
        %s120 = ssub.s32 %s12, 1
        // Predicated region
        $region13: #{single_pose_decode.1} parent=11 // pred_check
          %p121 = pneg %p59
        $region14: #{single_pose_decode.1} parent=11 // pred_check_branch
          %123 = sbr.rel (%p121) target = $region16
        $region15: #{single_pose_decode.1} parent=11 // pred_region
          _
        $region16: #{single_pose_decode.1} parent=11 // pred_fallthru
          _
        // Predicated region
        $region17: #{single_pose_decode.1} parent=11 // pred_check
          %p124 = pneg %p80
        $region18: #{single_pose_decode.1} parent=11 // pred_check_branch
          %126 = sbr.rel (%p124) target = $region20
        $region19: #{single_pose_decode.1} parent=11 // pred_region
          _
        $region20: #{single_pose_decode.1} parent=11 // pred_fallthru
          _
      $region12: #{single_pose_decode.1} parent=5 // pred_fallthru
        _
      %p127 = scmp.lt.s32.totalorder %s12, 2
      // Predicated region
      $region21: #{single_pose_decode.1} parent=5 // pred_check
        %p128 = pneg %p127
      $region22: #{single_pose_decode.1} parent=5 // pred_check_branch
        %130 = sbr.rel (%p128) target = $region24
      $region23: #{single_pose_decode.1} parent=5 // pred_region
        // Predicated region
        $region25: #{single_pose_decode.1} parent=23 // pred_check
          %p131 = pneg %p32
        $region26: #{single_pose_decode.1} parent=23 // pred_check_branch
          %133 = sbr.rel (%p131) target = $region28
        $region27: #{single_pose_decode.1} parent=23 // pred_region
          %p134 = scmp.lt.s32.totalorder %s12, 1
          %s135 = scalar_select %p134, %s12, 1
          %s136 = smul.addr %s135, 5
          %s137 = smul.addr %s136, 8
          %s138 = scalar_lea.vmem %s0, %s137
        $region28: #{single_pose_decode.1} parent=23 // pred_fallthru
          _
      $region24: #{single_pose_decode.1} parent=5 // pred_fallthru
        _
      %p139 = scmp.le.s32.totalorder 1, %s12
      %p140 = scmp.lt.s32.totalorder %s12, 3
      %p141 = pnand %p139, %p140
      %p142 = pneg %p141
      // Predicated region
      $region29: #{single_pose_decode.1} parent=5 // pred_check
        _
      $region30: #{single_pose_decode.1} parent=5 // pred_check_branch
        %144 = sbr.rel (%p141) target = $region32
      $region31: #{single_pose_decode.1} parent=5 // pred_region
        %s145 = ssub.s32 %s12, 1
        %p146 = scmp.lt.s32.totalorder %s17, 1
        %s147 = scalar_select %p146, %s17, 1
        %s148 = smul.addr %s147, 5
        %s149 = smul.addr %s148, 8
        %s150 = scalar_lea.vmem %s0, %s149
        %p151 = pneg %p38
        %p152 = pneg %p35
        %p153 = pneg %p59
        %p154 = pneg %p56
        %p155 = pneg %p80
        %p156 = pneg %p77
        %p157 = pneg %p106
        %p158 = pneg %p103
        %s159 = sand.u32 %s93, 1
        %s160 = scalar_lea.sflag [#allocation3], %s159
        %s161 = sand.u32 %s93, 1
        %s162 = smul.addr %s161, 48
        %s163 = scalar_lea.vmem [#allocation2], %s162
        %p164 = scmp.lt.s32.totalorder %s17, 1
        %s165 = scalar_select %p164, %s17, 1
        %s166 = smul.addr %s165, 5
        %s167 = smul.addr %s166, 8
        %s168 = scalar_lea.vmem %s0, %s167
        %v169 = vld [vmem:[%s168] sm:$0xff]
        %v170 = vld [vmem:[%s168 + $0x8] sm:$0xff]
        %v171 = vld [vmem:[%s168 + $0x10] sm:$0xff]
        %v172 = vld [vmem:[%s168 + $0x18] sm:$0xff]
        %v173 = vld [vmem:[%s168 + $0x20] sm:$0xff]
        %v174 = vld [vmem:[%s1] sm:$0xff]
        %v175 = vld [vmem:[%s1 + $0x8] sm:$0xff]
        %v176 = vld [vmem:[%s1 + $0x10] sm:$0xff]
        %v177 = vld [vmem:[%s1 + $0x18] sm:$0xff]
        %v178 = vld [vmem:[%s1 + $0x20] sm:$0xff]
        %v179 = vld [vmem:[%s1 + $0x28] sm:$0xff]
        %v180 = vld [vmem:[%s1 + $0x30] sm:$0xff]
        %v181 = vld [vmem:[%s1 + $0x38] sm:$0xff]
        %v182 = vld [vmem:[%s1 + $0x40] sm:$0xff]
        %v183 = vld [vmem:[%s1 + $0x48] sm:$0xff]
        %v184 = vld [vmem:[%s1 + $0x50] sm:$0xff]
        %v185 = vld [vmem:[%s1 + $0x58] sm:$0xff]
        %v186 = vld [vmem:[%s1 + $0x60] sm:$0xff]
        %v187 = vld [vmem:[%s1 + $0x68] sm:$0xff]
        %v188 = vld [vmem:[%s1 + $0x70] sm:$0xff]
        %v189 = vld [vmem:[%s1 + $0x78] sm:$0xff]
        %v190 = vld [vmem:[%s1 + $0x80] sm:$0xff]
        %v191 = vld [vmem:[%s1 + $0x88] sm:$0xff]
        %v192 = vld [vmem:[%s1 + $0x90] sm:$0xff]
        %v193 = vld [vmem:[%s1 + $0x98] sm:$0xff]
        %v194 = vld [vmem:[%s1 + $0xa0] sm:$0xff]
        %v195 = vld [vmem:[%s1 + $0xa8] sm:$0xff]
        %v196 = vld [vmem:[%s1 + $0xb0] sm:$0xff]
        %v197 = vld [vmem:[%s1 + $0xb8] sm:$0xff]
        %v198 = vld [vmem:[%s1 + $0xc0] sm:$0xff]
        %v199 = vld [vmem:[%s1 + $0xc8] sm:$0xff]
        %v200 = vld [vmem:[%s1 + $0xd0] sm:$0xff]
        %v201 = vld [vmem:[%s1 + $0xd8] sm:$0xff]
        %v202 = vld [vmem:[%s1 + $0xe0] sm:$0xff]
        %v203 = vld [vmem:[%s1 + $0xe8] sm:$0xff]
        %v204 = vld [vmem:[%s1 + $0xf0] sm:$0xff]
        %v205 = vld [vmem:[%s1 + $0xf8] sm:$0xff]
        %v206 = vld [vmem:[%s1 + $0x100] sm:$0xff]
        %v207 = vld [vmem:[%s1 + $0x108] sm:$0xff]
        %v208 = vld [vmem:[%s1 + $0x110] sm:$0xff]
        %v209 = vld [vmem:[%s1 + $0x118] sm:$0xff]
        %v210 = vld [vmem:[%s1 + $0x120] sm:$0xff]
        %v211 = vld [vmem:[%s1 + $0x128] sm:$0xff]
        %v212 = vld [vmem:[%s1 + $0x130] sm:$0xff]
        %v213 = vld [vmem:[%s1 + $0x138] sm:$0xff]
        %v214 = vld [vmem:[%s1 + $0x140] sm:$0xff]
        %v215 = vld [vmem:[%s1 + $0x148] sm:$0xff]
        %v216 = vld [vmem:[%s1 + $0x150] sm:$0xff]
        %v217 = vld [vmem:[%s1 + $0x158] sm:$0xff]
        %v218 = vld [vmem:[%s1 + $0x160] sm:$0xff]
        %v219 = vld [vmem:[%s1 + $0x168] sm:$0xff]
        %v220 = vld [vmem:[%s1 + $0x170] sm:$0xff]
        %v221 = vld [vmem:[%s1 + $0x178] sm:$0xff]
        %v222 = vld [vmem:[%s1 + $0x180] sm:$0xff]
        %v223 = vld [vmem:[%s1 + $0x188] sm:$0xff]
        %v224 = vld [vmem:[%s1 + $0x190] sm:$0xff]
        %v225 = vld [vmem:[%s1 + $0x198] sm:$0xff]
        %v226 = vld [vmem:[%s1 + $0x1a0] sm:$0xff]
        %v227 = vld [vmem:[%s1 + $0x1a8] sm:$0xff]
        %v228 = vld [vmem:[%s1 + $0x1b0] sm:$0xff]
        %v229 = vld [vmem:[%s1 + $0x1b8] sm:$0xff]
        %v230 = vld [vmem:[%s1 + $0x1c0] sm:$0xff]
        %v231 = vld [vmem:[%s1 + $0x1c8] sm:$0xff]
        %v232 = vld [vmem:[%s1 + $0x1d0] sm:$0xff]
        %v233 = vld [vmem:[%s1 + $0x1d8] sm:$0xff]
        %v234 = vld [vmem:[%s1 + $0x1e0] sm:$0xff]
        %v235 = vld [vmem:[%s1 + $0x1e8] sm:$0xff]
        %v236 = vld [vmem:[%s1 + $0x1f0] sm:$0xff]
        %v237 = vld [vmem:[%s1 + $0x1f8] sm:$0xff]
        %v238 = vld [vmem:[%s1 + $0x200] sm:$0xff]
        %v239 = vld [vmem:[%s1 + $0x208] sm:$0xff]
        %v240 = vld [vmem:[%s1 + $0x210] sm:$0xff]
        %v241 = vld [vmem:[%s1 + $0x218] sm:$0xff]
        %v242 = vld [vmem:[%s1 + $0x220] sm:$0xff]
        %v243 = vld [vmem:[%s1 + $0x228] sm:$0xff]
        %v244 = vld [vmem:[%s1 + $0x230] sm:$0xff]
        %v245 = vld [vmem:[%s1 + $0x238] sm:$0xff]
        %v246 = vld [vmem:[%s1 + $0x240] sm:$0xff]
        %v247 = vld [vmem:[%s1 + $0x248] sm:$0xff]
        %v248 = vld [vmem:[%s1 + $0x250] sm:$0xff]
        %v249 = vld [vmem:[%s1 + $0x258] sm:$0xff]
        %v250 = vld [vmem:[%s1 + $0x260] sm:$0xff]
        %v251 = vld [vmem:[%s1 + $0x268] sm:$0xff]
        %v252 = vld [vmem:[%s1 + $0x270] sm:$0xff]
        %v253 = vld [vmem:[%s1 + $0x278] sm:$0xff]
        %v254 = vld [vmem:[%s1 + $0x280] sm:$0xff]
        %v255 = vld [vmem:[%s1 + $0x288] sm:$0xff]
        %v256 = vld [vmem:[%s1 + $0x290] sm:$0xff]
        %v257 = vld [vmem:[%s1 + $0x298] sm:$0xff]
        %v258 = vld [vmem:[%s1 + $0x2a0] sm:$0xff]
        %v259 = vld [vmem:[%s1 + $0x2a8] sm:$0xff]
        %v260 = vld [vmem:[%s1 + $0x2b0] sm:$0xff]
        %v261 = vld [vmem:[%s1 + $0x2b8] sm:$0xff]
        %v262 = vld [vmem:[%s1 + $0x2c0] sm:$0xff]
        %v263 = vld [vmem:[%s1 + $0x2c8] sm:$0xff]
        %v264 = vld [vmem:[%s1 + $0x2d0] sm:$0xff]
        %v265 = vld [vmem:[%s1 + $0x2d8] sm:$0xff]
        %v266 = vld [vmem:[%s1 + $0x2e0] sm:$0xff]
        %v267 = vld [vmem:[%s1 + $0x2e8] sm:$0xff]
        %v268 = vld [vmem:[%s1 + $0x2f0] sm:$0xff]
        %v269 = vld [vmem:[%s1 + $0x2f8] sm:$0xff]
        %v270 = vld [vmem:[%s1 + $0x300] sm:$0xff]
        %v271 = vld [vmem:[%s1 + $0x308] sm:$0xff]
        %v272 = vld [vmem:[%s1 + $0x310] sm:$0xff]
        %v273 = vld [vmem:[%s1 + $0x318] sm:$0xff]
        %v274 = vld [vmem:[%s1 + $0x320] sm:$0xff]
        %v275 = vld [vmem:[%s1 + $0x328] sm:$0xff]
        %v276 = vld [vmem:[%s1 + $0x330] sm:$0xff]
        %v277 = vld [vmem:[%s1 + $0x338] sm:$0xff]
        %v278 = vld [vmem:[%s1 + $0x340] sm:$0xff]
        %v279 = vld [vmem:[%s1 + $0x348] sm:$0xff]
        %v280 = vld [vmem:[%s1 + $0x350] sm:$0xff]
        %v281 = vld [vmem:[%s1 + $0x358] sm:$0xff]
        %v282 = vld [vmem:[%s1 + $0x360] sm:$0xff]
        %v283 = vld [vmem:[%s1 + $0x368] sm:$0xff]
        %v284 = vld [vmem:[%s1 + $0x370] sm:$0xff]
        %v285 = vld [vmem:[%s1 + $0x378] sm:$0xff]
        %v286 = vld [vmem:[%s1 + $0x380] sm:$0xff]
        %v287 = vld [vmem:[%s1 + $0x388] sm:$0xff]
        %v288 = vld [vmem:[%s1 + $0x390] sm:$0xff]
        %v289 = vld [vmem:[%s1 + $0x398] sm:$0xff]
        %v290 = vld [vmem:[%s1 + $0x3a0] sm:$0xff]
        %v291 = vld [vmem:[%s1 + $0x3a8] sm:$0xff]
        %v292 = vld [vmem:[%s1 + $0x3b0] sm:$0xff]
        %v293 = vld [vmem:[%s1 + $0x3b8] sm:$0xff]
        %v294 = vld [vmem:[%s1 + $0x3c0] sm:$0xff]
        %v295 = vld [vmem:[%s1 + $0x3c8] sm:$0xff]
        %v296 = vld [vmem:[%s1 + $0x3d0] sm:$0xff]
        %v297 = vld [vmem:[%s1 + $0x3d8] sm:$0xff]
        %v298 = vld [vmem:[%s1 + $0x3e0] sm:$0xff]
        %v299 = vld [vmem:[%s1 + $0x3e8] sm:$0xff]
        %v300 = vld [vmem:[%s1 + $0x3f0] sm:$0xff]
        %v301 = vld [vmem:[%s1 + $0x3f8] sm:$0xff]
        %v302 = vld [vmem:[%s1 + $0x400] sm:$0xff]
        %v303 = vld [vmem:[%s1 + $0x408] sm:$0xff]
        %v304 = vld [vmem:[%s1 + $0x410] sm:$0xff]
        %v305 = vld [vmem:[%s1 + $0x418] sm:$0xff]
        %v306 = vld [vmem:[%s1 + $0x420] sm:$0xff]
        %v307 = vld [vmem:[%s1 + $0x428] sm:$0xff]
        %v308 = vld [vmem:[%s1 + $0x430] sm:$0xff]
        %v309 = vld [vmem:[%s1 + $0x438] sm:$0xff]
        %v310 = vld [vmem:[%s1 + $0x440] sm:$0xff]
        %v311 = vld [vmem:[%s1 + $0x448] sm:$0xff]
        %v312 = vld [vmem:[%s1 + $0x450] sm:$0xff]
        %v313 = vld [vmem:[%s1 + $0x458] sm:$0xff]
        %v314 = vld [vmem:[%s1 + $0x460] sm:$0xff]
        %v315 = vld [vmem:[%s1 + $0x468] sm:$0xff]
        %v316 = vld [vmem:[%s1 + $0x470] sm:$0xff]
        %v317 = vld [vmem:[%s1 + $0x478] sm:$0xff]
        %v318 = vld [vmem:[%s1 + $0x480] sm:$0xff]
        %v319 = vld [vmem:[%s1 + $0x488] sm:$0xff]
        %v320 = vld [vmem:[%s1 + $0x490] sm:$0xff]
        %v321 = vld [vmem:[%s1 + $0x498] sm:$0xff]
        %v322 = vld [vmem:[%s1 + $0x4a0] sm:$0xff]
        %v323 = vld [vmem:[%s1 + $0x4a8] sm:$0xff]
        %v324 = vld [vmem:[%s1 + $0x4b0] sm:$0xff]
        %v325 = vld [vmem:[%s1 + $0x4b8] sm:$0xff]
        %v326 = vld [vmem:[%s1 + $0x4c0] sm:$0xff]
        %v327 = vld [vmem:[%s1 + $0x4c8] sm:$0xff]
        %v328 = vld [vmem:[%s1 + $0x4d0] sm:$0xff]
        %v329 = vld [vmem:[%s1 + $0x4d8] sm:$0xff]
        %v330 = vld [vmem:[%s1 + $0x4e0] sm:$0xff]
        %v331 = vld [vmem:[%s1 + $0x4e8] sm:$0xff]
        %v332 = vld [vmem:[%s1 + $0x4f0] sm:$0xff]
        %v333 = vld [vmem:[%s1 + $0x4f8] sm:$0xff]
        %v334 = vld [vmem:[%s1 + $0x500] sm:$0xff]
        %v335 = vld [vmem:[%s1 + $0x508] sm:$0xff]
        %v336 = vld [vmem:[%s1 + $0x510] sm:$0xff]
        %v337 = vld [vmem:[%s1 + $0x518] sm:$0xff]
        %v338 = vld [vmem:[%s1 + $0x520] sm:$0xff]
        %v339 = vld [vmem:[%s1 + $0x528] sm:$0xff]
        %v340 = vld [vmem:[%s1 + $0x530] sm:$0xff]
        %v341 = vld [vmem:[%s1 + $0x538] sm:$0xff]
        %v342 = vld [vmem:[%s1 + $0x540] sm:$0xff]
        %v343 = vld [vmem:[%s1 + $0x548] sm:$0xff]
        %v344 = vld [vmem:[%s1 + $0x550] sm:$0xff]
        %v345 = vld [vmem:[%s1 + $0x558] sm:$0xff]
        %v346 = vld [vmem:[%s1 + $0x560] sm:$0xff]
        %v347 = vld [vmem:[%s1 + $0x568] sm:$0xff]
        %v348 = vld [vmem:[%s1 + $0x570] sm:$0xff]
        %v349 = vld [vmem:[%s1 + $0x578] sm:$0xff]
        %v350 = vld [vmem:[%s1 + $0x580] sm:$0xff]
        %v351 = vld [vmem:[%s1 + $0x588] sm:$0xff]
        %v352 = vld [vmem:[%s1 + $0x590] sm:$0xff]
        %v353 = vld [vmem:[%s1 + $0x598] sm:$0xff]
        %v354 = vld [vmem:[%s1 + $0x5a0] sm:$0xff]
        %v355 = vld [vmem:[%s1 + $0x5a8] sm:$0xff]
        %v356 = vld [vmem:[%s1 + $0x5b0] sm:$0xff]
        %v357 = vld [vmem:[%s1 + $0x5b8] sm:$0xff]
        %v358 = vld [vmem:[%s1 + $0x5c0] sm:$0xff]
        %v359 = vld [vmem:[%s1 + $0x5c8] sm:$0xff]
        %v360 = vld [vmem:[%s1 + $0x5d0] sm:$0xff]
        %v361 = vld [vmem:[%s1 + $0x5d8] sm:$0xff]
        %v362 = vld [vmem:[%s1 + $0x5e0] sm:$0xff]
        %v363 = vld [vmem:[%s1 + $0x5e8] sm:$0xff]
        %v364 = vld [vmem:[%s1 + $0x5f0] sm:$0xff]
        %v365 = vld [vmem:[%s1 + $0x5f8] sm:$0xff]
        %v366 = vld [vmem:[%s1 + $0x600] sm:$0xff]
        %v367 = vld [vmem:[%s1 + $0x608] sm:$0xff]
        %v368 = vld [vmem:[%s1 + $0x610] sm:$0xff]
        %v369 = vld [vmem:[%s1 + $0x618] sm:$0xff]
        %v370 = vld [vmem:[%s1 + $0x620] sm:$0xff]
        %v371 = vld [vmem:[%s1 + $0x628] sm:$0xff]
        %v372 = vld [vmem:[%s1 + $0x630] sm:$0xff]
        %v373 = vld [vmem:[%s1 + $0x638] sm:$0xff]
        %v374 = vld [vmem:[%s1 + $0x640] sm:$0xff]
        %v375 = vld [vmem:[%s1 + $0x648] sm:$0xff]
        %v376 = vld [vmem:[%s1 + $0x650] sm:$0xff]
        %v377 = vld [vmem:[%s1 + $0x658] sm:$0xff]
        %v378 = vld [vmem:[%s1 + $0x660] sm:$0xff]
        %v379 = vld [vmem:[%s1 + $0x668] sm:$0xff]
        %v380 = vld [vmem:[%s1 + $0x670] sm:$0xff]
        %v381 = vld [vmem:[%s1 + $0x678] sm:$0xff]
        %v382 = vld [vmem:[%s1 + $0x680] sm:$0xff]
        %v383 = vld [vmem:[%s1 + $0x688] sm:$0xff]
        %v384 = vld [vmem:[%s1 + $0x690] sm:$0xff]
        %v385 = vld [vmem:[%s1 + $0x698] sm:$0xff]
        %v386 = vld [vmem:[%s1 + $0x6a0] sm:$0xff]
        %v387 = vld [vmem:[%s1 + $0x6a8] sm:$0xff]
        %v388 = vld [vmem:[%s1 + $0x6b0] sm:$0xff]
        %v389 = vld [vmem:[%s1 + $0x6b8] sm:$0xff]
        %v390 = vld [vmem:[%s1 + $0x6c0] sm:$0xff]
        %v391 = vld [vmem:[%s1 + $0x6c8] sm:$0xff]
        %v392 = vld [vmem:[%s1 + $0x6d0] sm:$0xff]
        %v393 = vld [vmem:[%s1 + $0x6d8] sm:$0xff]
        %v394 = vld [vmem:[%s1 + $0x6e0] sm:$0xff]
        %v395 = vld [vmem:[%s1 + $0x6e8] sm:$0xff]
        %v396 = vld [vmem:[%s1 + $0x6f0] sm:$0xff]
        %v397 = vld [vmem:[%s1 + $0x6f8] sm:$0xff]
        %v398 = vld [vmem:[%s1 + $0x700] sm:$0xff]
        %v399 = vld [vmem:[%s1 + $0x708] sm:$0xff]
        %v400 = vld [vmem:[%s1 + $0x710] sm:$0xff]
        %v401 = vld [vmem:[%s1 + $0x718] sm:$0xff]
        %v402 = vld [vmem:[%s1 + $0x720] sm:$0xff]
        %v403 = vld [vmem:[%s1 + $0x728] sm:$0xff]
        %v404 = vld [vmem:[%s1 + $0x730] sm:$0xff]
        %v405 = vld [vmem:[%s1 + $0x738] sm:$0xff]
        %v406 = vld [vmem:[%s1 + $0x740] sm:$0xff]
        %v407 = vld [vmem:[%s1 + $0x748] sm:$0xff]
        %v408 = vld [vmem:[%s1 + $0x750] sm:$0xff]
        %v409 = vld [vmem:[%s1 + $0x758] sm:$0xff]
        %v410 = vld [vmem:[%s1 + $0x760] sm:$0xff]
        %v411 = vld [vmem:[%s1 + $0x768] sm:$0xff]
        %v412 = vld [vmem:[%s1 + $0x770] sm:$0xff]
        %v413 = vld [vmem:[%s1 + $0x778] sm:$0xff]
        %v414 = vld [vmem:[%s1 + $0x780] sm:$0xff]
        %v415 = vld [vmem:[%s1 + $0x788] sm:$0xff]
        %v416 = vld [vmem:[%s1 + $0x790] sm:$0xff]
        %v417 = vld [vmem:[%s1 + $0x798] sm:$0xff]
        %v418 = vld [vmem:[%s1 + $0x7a0] sm:$0xff]
        %v419 = vld [vmem:[%s1 + $0x7a8] sm:$0xff]
        %v420 = vld [vmem:[%s1 + $0x7b0] sm:$0xff]
        %v421 = vld [vmem:[%s1 + $0x7b8] sm:$0xff]
        %v422 = vld [vmem:[%s1 + $0x7c0] sm:$0xff]
        %v423 = vld [vmem:[%s1 + $0x7c8] sm:$0xff]
        %v424 = vld [vmem:[%s1 + $0x7d0] sm:$0xff]
        %v425 = vld [vmem:[%s1 + $0x7d8] sm:$0xff]
        %v426 = vld [vmem:[%s1 + $0x7e0] sm:$0xff]
        %v427 = vld [vmem:[%s1 + $0x7e8] sm:$0xff]
        %v428 = vld [vmem:[%s1 + $0x7f0] sm:$0xff]
        %v429 = vld [vmem:[%s1 + $0x7f8] sm:$0xff]
        %v430 = vld [vmem:[%s1 + $0x800] sm:$0xff]
        %v431 = vld [vmem:[%s1 + $0x808] sm:$0xff]
        %v432 = vld [vmem:[%s1 + $0x810] sm:$0xff]
        %v433 = vld [vmem:[%s1 + $0x818] sm:$0xff]
        %v434 = vld [vmem:[%s1 + $0x820] sm:$0xff]
        %v435 = vld [vmem:[%s1 + $0x828] sm:$0xff]
        %v436 = vld [vmem:[%s1 + $0x830] sm:$0xff]
        %v437 = vld [vmem:[%s1 + $0x838] sm:$0xff]
        %v438 = vld [vmem:[%s1 + $0x840] sm:$0xff]
        %v439 = vld [vmem:[%s1 + $0x848] sm:$0xff]
        %v440 = vld [vmem:[%s1 + $0x850] sm:$0xff]
        %v441 = vld [vmem:[%s1 + $0x858] sm:$0xff]
        %v442 = vld [vmem:[%s1 + $0x860] sm:$0xff]
        %v443 = vld [vmem:[%s1 + $0x868] sm:$0xff]
        %v444 = vld [vmem:[%s1 + $0x870] sm:$0xff]
        %v445 = vld [vmem:[%s1 + $0x878] sm:$0xff]
        %v446 = vld [vmem:[%s1 + $0x880] sm:$0xff]
        %v447 = vld [vmem:[%s1 + $0x888] sm:$0xff]
        %v448 = vld [vmem:[%s1 + $0x890] sm:$0xff]
        %v449 = vld [vmem:[%s1 + $0x898] sm:$0xff]
        %v450 = vld [vmem:[%s1 + $0x8a0] sm:$0xff]
        %v451 = vld [vmem:[%s1 + $0x8a8] sm:$0xff]
        %v452 = vld [vmem:[%s1 + $0x8b0] sm:$0xff]
        %v453 = vld [vmem:[%s1 + $0x8b8] sm:$0xff]
        %v454 = vld [vmem:[%s1 + $0x8c0] sm:$0xff]
        %v455 = vld [vmem:[%s1 + $0x8c8] sm:$0xff]
        %v456 = vld [vmem:[%s1 + $0x8d0] sm:$0xff]
        %v457 = vld [vmem:[%s1 + $0x8d8] sm:$0xff]
        %v458 = vld [vmem:[%s1 + $0x8e0] sm:$0xff]
        %v459 = vld [vmem:[%s1 + $0x8e8] sm:$0xff]
        %v460 = vld [vmem:[%s1 + $0x8f0] sm:$0xff]
        %v461 = vld [vmem:[%s1 + $0x8f8] sm:$0xff]
        %v462 = vld [vmem:[%s1 + $0x900] sm:$0xff]
        %v463 = vld [vmem:[%s1 + $0x908] sm:$0xff]
        %v464 = vld [vmem:[%s1 + $0x910] sm:$0xff]
        %v465 = vld [vmem:[%s1 + $0x918] sm:$0xff]
        %v466 = vld [vmem:[%s1 + $0x920] sm:$0xff]
        %v467 = vld [vmem:[%s1 + $0x928] sm:$0xff]
        %v468 = vld [vmem:[%s1 + $0x930] sm:$0xff]
        %v469 = vld [vmem:[%s1 + $0x938] sm:$0xff]
        %v470 = vld [vmem:[%s1 + $0x940] sm:$0xff]
        %v471 = vld [vmem:[%s1 + $0x948] sm:$0xff]
        %v472 = vld [vmem:[%s1 + $0x950] sm:$0xff]
        %v473 = vld [vmem:[%s1 + $0x958] sm:$0xff]
        %v474 = vld [vmem:[%s1 + $0x960] sm:$0xff]
        %v475 = vld [vmem:[%s1 + $0x968] sm:$0xff]
        %v476 = vld [vmem:[%s1 + $0x970] sm:$0xff]
        %v477 = vld [vmem:[%s1 + $0x978] sm:$0xff]
        %v478 = vld [vmem:[%s1 + $0x980] sm:$0xff]
        %v479 = vld [vmem:[%s1 + $0x988] sm:$0xff]
        %v480 = vld [vmem:[%s1 + $0x990] sm:$0xff]
        %v481 = vld [vmem:[%s1 + $0x998] sm:$0xff]
        %v482 = vld [vmem:[%s1 + $0x9a0] sm:$0xff]
        %v483 = vld [vmem:[%s1 + $0x9a8] sm:$0xff]
        %v484 = vld [vmem:[%s1 + $0x9b0] sm:$0xff]
        %v485 = vld [vmem:[%s1 + $0x9b8] sm:$0xff]
        %v486 = vld [vmem:[%s1 + $0x9c0] sm:$0xff]
        %v487 = vld [vmem:[%s1 + $0x9c8] sm:$0xff]
        %v488 = vld [vmem:[%s1 + $0x9d0] sm:$0xff]
        %v489 = vld [vmem:[%s1 + $0x9d8] sm:$0xff]
        %v490 = vld [vmem:[%s1 + $0x9e0] sm:$0xff]
        %v491 = vld [vmem:[%s1 + $0x9e8] sm:$0xff]
        %v492 = vld [vmem:[%s1 + $0x9f0] sm:$0xff]
        %v493 = vld [vmem:[%s1 + $0x9f8] sm:$0xff]
        %v494 = vld [vmem:[%s1 + $0xa00] sm:$0xff]
        %v495 = vld [vmem:[%s1 + $0xa08] sm:$0xff]
        %v496 = vld [vmem:[%s1 + $0xa10] sm:$0xff]
        %v497 = vld [vmem:[%s1 + $0xa18] sm:$0xff]
        %v498 = vld [vmem:[%s1 + $0xa20] sm:$0xff]
        %v499 = vld [vmem:[%s1 + $0xa28] sm:$0xff]
        %v500 = vld [vmem:[%s1 + $0xa30] sm:$0xff]
        %v501 = vld [vmem:[%s1 + $0xa38] sm:$0xff]
        %v502 = vld [vmem:[%s1 + $0xa40] sm:$0xff]
        %v503 = vld [vmem:[%s1 + $0xa48] sm:$0xff]
        %v504 = vld [vmem:[%s1 + $0xa50] sm:$0xff]
        %v505 = vld [vmem:[%s1 + $0xa58] sm:$0xff]
        %v506 = vld [vmem:[%s1 + $0xa60] sm:$0xff]
        %v507 = vld [vmem:[%s1 + $0xa68] sm:$0xff]
        %v508 = vld [vmem:[%s1 + $0xa70] sm:$0xff]
        %v509 = vld [vmem:[%s1 + $0xa78] sm:$0xff]
        %v510 = vld [vmem:[%s1 + $0xa80] sm:$0xff]
        %v511 = vld [vmem:[%s1 + $0xa88] sm:$0xff]
        %v512 = vld [vmem:[%s1 + $0xa90] sm:$0xff]
        %v513 = vld [vmem:[%s1 + $0xa98] sm:$0xff]
        %v514 = vld [vmem:[%s1 + $0xaa0] sm:$0xff]
        %v515 = vld [vmem:[%s1 + $0xaa8] sm:$0xff]
        %v516 = vld [vmem:[%s1 + $0xab0] sm:$0xff]
        %v517 = vld [vmem:[%s1 + $0xab8] sm:$0xff]
        %v518 = vld [vmem:[%s1 + $0xac0] sm:$0xff]
        %v519 = vld [vmem:[%s1 + $0xac8] sm:$0xff]
        %v520 = vld [vmem:[%s1 + $0xad0] sm:$0xff]
        %v521 = vld [vmem:[%s1 + $0xad8] sm:$0xff]
        %v522 = vld [vmem:[%s1 + $0xae0] sm:$0xff]
        %v523 = vld [vmem:[%s1 + $0xae8] sm:$0xff]
        %v524 = vld [vmem:[%s1 + $0xaf0] sm:$0xff]
        %v525 = vld [vmem:[%s1 + $0xaf8] sm:$0xff]
        %v526 = vld [vmem:[%s1 + $0xb00] sm:$0xff]
        %v527 = vld [vmem:[%s1 + $0xb08] sm:$0xff]
        %v528 = vld [vmem:[%s1 + $0xb10] sm:$0xff]
        %v529 = vld [vmem:[%s1 + $0xb18] sm:$0xff]
        %v530 = vld [vmem:[%s1 + $0xb20] sm:$0xff]
        %v531 = vld [vmem:[%s1 + $0xb28] sm:$0xff]
        %v532 = vld [vmem:[%s1 + $0xb30] sm:$0xff]
        %v533 = vld [vmem:[%s1 + $0xb38] sm:$0xff]
        %v534 = vld [vmem:[%s1 + $0xb40] sm:$0xff]
        %v535 = vld [vmem:[%s1 + $0xb48] sm:$0xff]
        %v536 = vld [vmem:[%s1 + $0xb50] sm:$0xff]
        %v537 = vld [vmem:[%s1 + $0xb58] sm:$0xff]
        %v538 = vld [vmem:[%s1 + $0xb60] sm:$0xff]
        %v539 = vld [vmem:[%s1 + $0xb68] sm:$0xff]
        %v540 = vld [vmem:[%s1 + $0xb70] sm:$0xff]
        %v541 = vld [vmem:[%s1 + $0xb78] sm:$0xff]
        %v542 = vld [vmem:[%s1 + $0xb80] sm:$0xff]
        %v543 = vld [vmem:[%s1 + $0xb88] sm:$0xff]
        %v544 = vld [vmem:[%s1 + $0xb90] sm:$0xff]
        %v545 = vld [vmem:[%s1 + $0xb98] sm:$0xff]
        %v546 = vld [vmem:[%s1 + $0xba0] sm:$0xff]
        %v547 = vld [vmem:[%s1 + $0xba8] sm:$0xff]
        %v548 = vld [vmem:[%s1 + $0xbb0] sm:$0xff]
        %v549 = vld [vmem:[%s1 + $0xbb8] sm:$0xff]
        %v550 = vld [vmem:[%s1 + $0xbc0] sm:$0xff]
        %v551 = vld [vmem:[%s1 + $0xbc8] sm:$0xff]
        %v552 = vld [vmem:[%s1 + $0xbd0] sm:$0xff]
        %v553 = vld [vmem:[%s1 + $0xbd8] sm:$0xff]
        %v554 = vld [vmem:[%s1 + $0xbe0] sm:$0xff]
        %v555 = vld [vmem:[%s1 + $0xbe8] sm:$0xff]
        %v556 = vld [vmem:[%s1 + $0xbf0] sm:$0xff]
        %v557 = vld [vmem:[%s1 + $0xbf8] sm:$0xff]
        %v558 = vld [vmem:[%s1 + $0xc00] sm:$0xff]
        %v559 = vld [vmem:[%s1 + $0xc08] sm:$0xff]
        %v560 = vld [vmem:[%s1 + $0xc10] sm:$0xff]
        %v561 = vld [vmem:[%s1 + $0xc18] sm:$0xff]
        %v562 = vld [vmem:[%s1 + $0xc20] sm:$0xff]
        %v563 = vld [vmem:[%s1 + $0xc28] sm:$0xff]
        %v564 = vld [vmem:[%s1 + $0xc30] sm:$0xff]
        %v565 = vld [vmem:[%s1 + $0xc38] sm:$0xff]
        %v566 = vld [vmem:[%s1 + $0xc40] sm:$0xff]
        %v567 = vld [vmem:[%s1 + $0xc48] sm:$0xff]
        %v568 = vld [vmem:[%s1 + $0xc50] sm:$0xff]
        %v569 = vld [vmem:[%s1 + $0xc58] sm:$0xff]
        %v570 = vld [vmem:[%s1 + $0xc60] sm:$0xff]
        %v571 = vld [vmem:[%s1 + $0xc68] sm:$0xff]
        %v572 = vld [vmem:[%s1 + $0xc70] sm:$0xff]
        %v573 = vld [vmem:[%s1 + $0xc78] sm:$0xff]
        %v574 = vld [vmem:[%s1 + $0xc80] sm:$0xff]
        %v575 = vld [vmem:[%s1 + $0xc88] sm:$0xff]
        %v576 = vld [vmem:[%s1 + $0xc90] sm:$0xff]
        %v577 = vld [vmem:[%s1 + $0xc98] sm:$0xff]
        %v578 = vld [vmem:[%s1 + $0xca0] sm:$0xff]
        %v579 = vld [vmem:[%s1 + $0xca8] sm:$0xff]
        %v580 = vld [vmem:[%s1 + $0xcb0] sm:$0xff]
        %v581 = vld [vmem:[%s1 + $0xcb8] sm:$0xff]
        %v582 = vld [vmem:[%s1 + $0xcc0] sm:$0xff]
        %v583 = vld [vmem:[%s1 + $0xcc8] sm:$0xff]
        %v584 = vld [vmem:[%s1 + $0xcd0] sm:$0xff]
        %v585 = vld [vmem:[%s1 + $0xcd8] sm:$0xff]
        %v586 = vld [vmem:[%s1 + $0xce0] sm:$0xff]
        %v587 = vld [vmem:[%s1 + $0xce8] sm:$0xff]
        %v588 = vld [vmem:[%s1 + $0xcf0] sm:$0xff]
        %v589 = vld [vmem:[%s1 + $0xcf8] sm:$0xff]
        %v590 = vld [vmem:[%s1 + $0xd00] sm:$0xff]
        %v591 = vld [vmem:[%s1 + $0xd08] sm:$0xff]
        %v592 = vld [vmem:[%s1 + $0xd10] sm:$0xff]
        %v593 = vld [vmem:[%s1 + $0xd18] sm:$0xff]
        %v594 = vld [vmem:[%s1 + $0xd20] sm:$0xff]
        %v595 = vld [vmem:[%s1 + $0xd28] sm:$0xff]
        %v596 = vld [vmem:[%s1 + $0xd30] sm:$0xff]
        %v597 = vld [vmem:[%s1 + $0xd38] sm:$0xff]
        %v598 = vld [vmem:[%s1 + $0xd40] sm:$0xff]
        %v599 = vld [vmem:[%s1 + $0xd48] sm:$0xff]
        %v600 = vld [vmem:[%s1 + $0xd50] sm:$0xff]
        %v601 = vld [vmem:[%s1 + $0xd58] sm:$0xff]
        %v602 = vld [vmem:[%s1 + $0xd60] sm:$0xff]
        %v603 = vld [vmem:[%s1 + $0xd68] sm:$0xff]
        %v604 = vld [vmem:[%s1 + $0xd70] sm:$0xff]
        %v605 = vld [vmem:[%s1 + $0xd78] sm:$0xff]
        %v606 = vld [vmem:[%s1 + $0xd80] sm:$0xff]
        %v607 = vld [vmem:[%s1 + $0xd88] sm:$0xff]
        %v608 = vld [vmem:[%s1 + $0xd90] sm:$0xff]
        %v609 = vld [vmem:[%s1 + $0xd98] sm:$0xff]
        %v610 = vld [vmem:[%s1 + $0xda0] sm:$0xff]
        %v611 = vld [vmem:[%s1 + $0xda8] sm:$0xff]
        %v612 = vld [vmem:[%s1 + $0xdb0] sm:$0xff]
        %v613 = vld [vmem:[%s1 + $0xdb8] sm:$0xff]
        %v614 = vld [vmem:[%s1 + $0xdc0] sm:$0xff]
        %v615 = vld [vmem:[%s1 + $0xdc8] sm:$0xff]
        %v616 = vld [vmem:[%s1 + $0xdd0] sm:$0xff]
        %v617 = vld [vmem:[%s1 + $0xdd8] sm:$0xff]
        %v618 = vld [vmem:[%s1 + $0xde0] sm:$0xff]
        %v619 = vld [vmem:[%s1 + $0xde8] sm:$0xff]
        %v620 = vld [vmem:[%s1 + $0xdf0] sm:$0xff]
        %v621 = vld [vmem:[%s1 + $0xdf8] sm:$0xff]
        %v622 = vld [vmem:[%s1 + $0xe00] sm:$0xff]
        %v623 = vld [vmem:[%s1 + $0xe08] sm:$0xff]
        %v624 = vld [vmem:[%s1 + $0xe10] sm:$0xff]
        %v625 = vld [vmem:[%s1 + $0xe18] sm:$0xff]
        %v626 = vld [vmem:[%s1 + $0xe20] sm:$0xff]
        %v627 = vld [vmem:[%s1 + $0xe28] sm:$0xff]
        %v628 = vld [vmem:[%s1 + $0xe30] sm:$0xff]
        %v629 = vld [vmem:[%s1 + $0xe38] sm:$0xff]
        %v630 = vld [vmem:[%s1 + $0xe40] sm:$0xff]
        %v631 = vld [vmem:[%s1 + $0xe48] sm:$0xff]
        %v632 = vld [vmem:[%s1 + $0xe50] sm:$0xff]
        %v633 = vld [vmem:[%s1 + $0xe58] sm:$0xff]
        %v634 = vld [vmem:[%s1 + $0xe60] sm:$0xff]
        %v635 = vld [vmem:[%s1 + $0xe68] sm:$0xff]
        %v636 = vld [vmem:[%s1 + $0xe70] sm:$0xff]
        %v637 = vld [vmem:[%s1 + $0xe78] sm:$0xff]
        %v638 = vld [vmem:[%s1 + $0xe80] sm:$0xff]
        %v639 = vld [vmem:[%s1 + $0xe88] sm:$0xff]
        %v640 = vld [vmem:[%s1 + $0xe90] sm:$0xff]
        %v641 = vld [vmem:[%s1 + $0xe98] sm:$0xff]
        %v642 = vld [vmem:[%s1 + $0xea0] sm:$0xff]
        %v643 = vld [vmem:[%s1 + $0xea8] sm:$0xff]
        %v644 = vld [vmem:[%s1 + $0xeb0] sm:$0xff]
        %v645 = vld [vmem:[%s1 + $0xeb8] sm:$0xff]
        %v646 = vld [vmem:[%s1 + $0xec0] sm:$0xff]
        %v647 = vld [vmem:[%s1 + $0xec8] sm:$0xff]
        %v648 = vld [vmem:[%s1 + $0xed0] sm:$0xff]
        %v649 = vld [vmem:[%s1 + $0xed8] sm:$0xff]
        %v650 = vld [vmem:[%s1 + $0xee0] sm:$0xff]
        %v651 = vld [vmem:[%s1 + $0xee8] sm:$0xff]
        %v652 = vld [vmem:[%s1 + $0xef0] sm:$0xff]
        %v653 = vld [vmem:[%s1 + $0xef8] sm:$0xff]
        %v654 = vld [vmem:[%s2] sm:$0x3f]
        %v656 = vlaneseq
        %v657 = vshrl.u32 %v656, 7
        %v658 = vsub.s32 0, %v657
        %v659 = vrot.slane %v654, %v658
        %v660 = vlaneseq
        %v661 = vshrl.u32 %v660, 7
        %v662 = vsub.s32 1, %v661
        %v663 = vrot.slane %v654, %v662
        %v664 = vlaneseq
        %v665 = vshrl.u32 %v664, 7
        %v666 = vsub.s32 2, %v665
        %v667 = vrot.slane %v654, %v666
        %v668 = vlaneseq
        %v669 = vshrl.u32 %v668, 7
        %v670 = vsub.s32 3, %v669
        %v671 = vrot.slane %v654, %v670
        %v672 = vlaneseq
        %v673 = vshrl.u32 %v672, 7
        %v674 = vsub.s32 4, %v673
        %v675 = vrot.slane %v654, %v674
        %v676 = vlaneseq
        %v677 = vshrl.u32 %v676, 7
        %v678 = vsub.s32 5, %v677
        %v679 = vrot.slane %v654, %v678
        %686 = vmatprep.subr.mxu0 %v175
        %687 = vmatpush1.msra.mxu0 %v174
        %688 = vmatprep.subr.mxu0 %v181
        %689 = vmatpush1.msra.mxu0 %v180
        %690 = vmatprep.subr.mxu0 %v187
        %691 = vmatpush1.msra.mxu0 %v186
        %692 = vmatprep.subr.mxu0 %v193
        %693 = vmatpush1.msra.mxu0 %v192
        %694 = vmatprep.subr.mxu0 %v199
        %695 = vmatpush1.msra.mxu0 %v198
        %696 = vmatprep.subr.mxu0 %v205
        %697 = vmatpush1.msra.mxu0 %v204
        %698 = vmatprep.subr.mxu0 %v211
        %699 = vmatpush1.msra.mxu0 %v210
        %700 = vmatprep.subr.mxu0 %v217
        %701 = vmatpush1.msra.mxu0 %v216
        %702 = vmatprep.subr.mxu0 %v223
        %703 = vmatpush1.msra.mxu0 %v222
        %704 = vmatprep.subr.mxu0 %v229
        %705 = vmatpush1.msra.mxu0 %v228
        %706 = vmatprep.subr.mxu0 %v235
        %707 = vmatpush1.msra.mxu0 %v234
        %708 = vmatprep.subr.mxu0 %v241
        %709 = vmatpush1.msra.mxu0 %v240
        %710 = vmatprep.subr.mxu0 %v247
        %711 = vmatpush1.msra.mxu0 %v246
        %712 = vmatprep.subr.mxu0 %v253
        %713 = vmatpush1.msra.mxu0 %v252
        %714 = vmatprep.subr.mxu0 %v259
        %715 = vmatpush1.msra.mxu0 %v258
        %716 = vmatprep.subr.mxu0 %v265
        %717 = vmatpush1.msra.mxu0 %v264
        %718 = vmatprep.subr.mxu0 %v271
        %719 = vmatpush1.msra.mxu0 %v270
        %720 = vmatprep.subr.mxu0 %v277
        %721 = vmatpush1.msra.mxu0 %v276
        %722 = vmatprep.subr.mxu0 %v283
        %723 = vmatpush1.msra.mxu0 %v282
        %724 = vmatprep.subr.mxu0 %v289
        %725 = vmatpush1.msra.mxu0 %v288
        %726 = vmatprep.subr.mxu0 %v295
        %727 = vmatpush1.msra.mxu0 %v294
        %728 = vmatprep.subr.mxu0 %v301
        %729 = vmatpush1.msra.mxu0 %v300
        %730 = vmatprep.subr.mxu0 %v307
        %731 = vmatpush1.msra.mxu0 %v306
        %732 = vmatprep.subr.mxu0 %v313
        %733 = vmatpush1.msra.mxu0 %v312
        %734 = vmatprep.subr.mxu0 %v319
        %735 = vmatpush1.msra.mxu0 %v318
        %736 = vmatprep.subr.mxu0 %v325
        %737 = vmatpush1.msra.mxu0 %v324
        %738 = vmatprep.subr.mxu0 %v331
        %739 = vmatpush1.msra.mxu0 %v330
        %740 = vmatprep.subr.mxu0 %v337
        %741 = vmatpush1.msra.mxu0 %v336
        %742 = vmatprep.subr.mxu0 %v343
        %743 = vmatpush1.msra.mxu0 %v342
        %744 = vmatprep.subr.mxu0 %v349
        %745 = vmatpush1.msra.mxu0 %v348
        %746 = vmatprep.subr.mxu0 %v355
        %747 = vmatpush1.msra.mxu0 %v354
        %748 = vmatprep.subr.mxu0 %v361
        %749 = vmatpush1.msra.mxu0 %v360
        %750 = vmatprep.mubr.f32.mxu0 %v170
        %751 = vmatmul.mubr.f32.gmra.mrb[0].mxu0 %v169
        %v752 = vpop.f32.mrb[0].mxu0
        %v753 = vadd.f32 %v659, %v752
        %v754 = vpop.f32.mrb[0].mxu0
        %v755 = vadd.f32 %v663, %v754
        %756 = vdwg.mxu0
        %757 = vmatprep.subr.mxu0 %v367
        %758 = vmatpush1.msra.mxu0 %v366
        %759 = vmatprep.subr.mxu0 %v373
        %760 = vmatpush1.msra.mxu0 %v372
        %761 = vmatprep.subr.mxu0 %v379
        %762 = vmatpush1.msra.mxu0 %v378
        %763 = vmatprep.subr.mxu0 %v385
        %764 = vmatpush1.msra.mxu0 %v384
        %765 = vmatprep.subr.mxu0 %v391
        %766 = vmatpush1.msra.mxu0 %v390
        %767 = vmatprep.subr.mxu0 %v397
        %768 = vmatpush1.msra.mxu0 %v396
        %769 = vmatprep.subr.mxu0 %v403
        %770 = vmatpush1.msra.mxu0 %v402
        %771 = vmatprep.subr.mxu0 %v409
        %772 = vmatpush1.msra.mxu0 %v408
        %773 = vmatprep.subr.mxu0 %v415
        %774 = vmatpush1.msra.mxu0 %v414
        %775 = vmatprep.subr.mxu0 %v421
        %776 = vmatpush1.msra.mxu0 %v420
        %777 = vmatprep.subr.mxu0 %v427
        %778 = vmatpush1.msra.mxu0 %v426
        %779 = vmatprep.subr.mxu0 %v433
        %780 = vmatpush1.msra.mxu0 %v432
        %781 = vmatprep.subr.mxu0 %v439
        %782 = vmatpush1.msra.mxu0 %v438
        %783 = vmatprep.subr.mxu0 %v445
        %784 = vmatpush1.msra.mxu0 %v444
        %785 = vmatprep.subr.mxu0 %v451
        %786 = vmatpush1.msra.mxu0 %v450
        %787 = vmatprep.subr.mxu0 %v457
        %788 = vmatpush1.msra.mxu0 %v456
        %789 = vmatprep.subr.mxu0 %v463
        %790 = vmatpush1.msra.mxu0 %v462
        %791 = vmatprep.subr.mxu0 %v469
        %792 = vmatpush1.msra.mxu0 %v468
        %793 = vmatprep.subr.mxu0 %v475
        %794 = vmatpush1.msra.mxu0 %v474
        %795 = vmatprep.subr.mxu0 %v481
        %796 = vmatpush1.msra.mxu0 %v480
        %797 = vmatprep.subr.mxu0 %v487
        %798 = vmatpush1.msra.mxu0 %v486
        %799 = vmatprep.subr.mxu0 %v493
        %800 = vmatpush1.msra.mxu0 %v492
        %801 = vmatprep.subr.mxu0 %v499
        %802 = vmatpush1.msra.mxu0 %v498
        %803 = vmatprep.subr.mxu0 %v505
        %804 = vmatpush1.msra.mxu0 %v504
        %805 = vmatprep.subr.mxu0 %v511
        %806 = vmatpush1.msra.mxu0 %v510
        %807 = vmatprep.subr.mxu0 %v517
        %808 = vmatpush1.msra.mxu0 %v516
        %809 = vmatprep.subr.mxu0 %v523
        %810 = vmatpush1.msra.mxu0 %v522
        %811 = vmatprep.subr.mxu0 %v529
        %812 = vmatpush1.msra.mxu0 %v528
        %813 = vmatprep.subr.mxu0 %v535
        %814 = vmatpush1.msra.mxu0 %v534
        %815 = vmatprep.subr.mxu0 %v541
        %816 = vmatpush1.msra.mxu0 %v540
        %817 = vmatprep.subr.mxu0 %v547
        %818 = vmatpush1.msra.mxu0 %v546
        %819 = vmatprep.subr.mxu0 %v553
        %820 = vmatpush1.msra.mxu0 %v552
        %821 = vmatprep.mubr.f32.mxu0 %v172
        %822 = vmatmul.mubr.f32.gmra.mrb[0].mxu0 %v171
        %v823 = vpop.f32.mrb[0].mxu0
        %v824 = vadd.f32 %v753, %v823
        %v825 = vpop.f32.mrb[0].mxu0
        %v826 = vadd.f32 %v755, %v825
        %827 = vdwg.mxu0
        %828 = vmatprep.subr.mxu0 %v559
        %829 = vmatpush1.msra.mxu0 %v558
        %830 = vmatprep.subr.mxu0 %v565
        %831 = vmatpush1.msra.mxu0 %v564
        %832 = vmatprep.subr.mxu0 %v571
        %833 = vmatpush1.msra.mxu0 %v570
        %834 = vmatprep.subr.mxu0 %v577
        %835 = vmatpush1.msra.mxu0 %v576
        %836 = vmatprep.subr.mxu0 %v583
        %837 = vmatpush1.msra.mxu0 %v582
        %838 = vmatprep.subr.mxu0 %v589
        %839 = vmatpush1.msra.mxu0 %v588
        %840 = vmatprep.subr.mxu0 %v595
        %841 = vmatpush1.msra.mxu0 %v594
        %842 = vmatprep.subr.mxu0 %v601
        %843 = vmatpush1.msra.mxu0 %v600
        %844 = vmatprep.subr.mxu0 %v607
        %845 = vmatpush1.msra.mxu0 %v606
        %846 = vmatprep.subr.mxu0 %v613
        %847 = vmatpush1.msra.mxu0 %v612
        %848 = vmatprep.subr.mxu0 %v619
        %849 = vmatpush1.msra.mxu0 %v618
        %850 = vmatprep.subr.mxu0 %v625
        %851 = vmatpush1.msra.mxu0 %v624
        %852 = vmatprep.subr.mxu0 %v631
        %853 = vmatpush1.msra.mxu0 %v630
        %854 = vmatprep.subr.mxu0 %v637
        %855 = vmatpush1.msra.mxu0 %v636
        %856 = vmatprep.subr.mxu0 %v643
        %857 = vmatpush1.msra.mxu0 %v642
        %858 = vmatprep.subr.mxu0 %v649
        %859 = vmatpush1.msra.mxu0 %v648
        %860 = vmatprep.subr.mxu0 0.0
        %861 = vmatpush1.msra.mxu0 0.0
        %862 = vmatprep.subr.mxu0 0.0
        %863 = vmatpush1.msra.mxu0 0.0
        %864 = vmatprep.subr.mxu0 0.0
        %865 = vmatpush1.msra.mxu0 0.0
        %866 = vmatprep.subr.mxu0 0.0
        %867 = vmatpush1.msra.mxu0 0.0
        %868 = vmatprep.subr.mxu0 0.0
        %869 = vmatpush1.msra.mxu0 0.0
        %870 = vmatprep.subr.mxu0 0.0
        %871 = vmatpush1.msra.mxu0 0.0
        %872 = vmatprep.subr.mxu0 0.0
        %873 = vmatpush1.msra.mxu0 0.0
        %874 = vmatprep.subr.mxu0 0.0
        %875 = vmatpush1.msra.mxu0 0.0
        %876 = vmatprep.subr.mxu0 0.0
        %877 = vmatpush1.msra.mxu0 0.0
        %878 = vmatprep.subr.mxu0 0.0
        %879 = vmatpush1.msra.mxu0 0.0
        %880 = vmatprep.subr.mxu0 0.0
        %881 = vmatpush1.msra.mxu0 0.0
        %882 = vmatprep.subr.mxu0 0.0
        %883 = vmatpush1.msra.mxu0 0.0
        %884 = vmatprep.subr.mxu0 0.0
        %885 = vmatpush1.msra.mxu0 0.0
        %886 = vmatprep.subr.mxu0 0.0
        %887 = vmatpush1.msra.mxu0 0.0
        %888 = vmatprep.subr.mxu0 0.0
        %889 = vmatpush1.msra.mxu0 0.0
        %890 = vmatprep.subr.mxu0 0.0
        %891 = vmatpush1.msra.mxu0 0.0
        %892 = vmatprep.mubr.f32.mxu0 0.0
        %893 = vmatmul.mubr.f32.gmra.mrb[0].mxu0 %v173
        %v894 = vpop.f32.mrb[0].mxu0
        %v895 = vadd.f32 %v824, %v894
        %v896 = vpop.f32.mrb[0].mxu0
        %v897 = vadd.f32 %v826, %v896
        %898 = vdwg.mxu0
        %899 = vmatprep.subr.mxu0 %v177
        %900 = vmatpush1.msra.mxu0 %v176
        %901 = vmatprep.subr.mxu0 %v183
        %902 = vmatpush1.msra.mxu0 %v182
        %903 = vmatprep.subr.mxu0 %v189
        %904 = vmatpush1.msra.mxu0 %v188
        %905 = vmatprep.subr.mxu0 %v195
        %906 = vmatpush1.msra.mxu0 %v194
        %907 = vmatprep.subr.mxu0 %v201
        %908 = vmatpush1.msra.mxu0 %v200
        %909 = vmatprep.subr.mxu0 %v207
        %910 = vmatpush1.msra.mxu0 %v206
        %911 = vmatprep.subr.mxu0 %v213
        %912 = vmatpush1.msra.mxu0 %v212
        %913 = vmatprep.subr.mxu0 %v219
        %914 = vmatpush1.msra.mxu0 %v218
        %915 = vmatprep.subr.mxu0 %v225
        %916 = vmatpush1.msra.mxu0 %v224
        %917 = vmatprep.subr.mxu0 %v231
        %918 = vmatpush1.msra.mxu0 %v230
        %919 = vmatprep.subr.mxu0 %v237
        %920 = vmatpush1.msra.mxu0 %v236
        %921 = vmatprep.subr.mxu0 %v243
        %922 = vmatpush1.msra.mxu0 %v242
        %923 = vmatprep.subr.mxu0 %v249
        %924 = vmatpush1.msra.mxu0 %v248
        %925 = vmatprep.subr.mxu0 %v255
        %926 = vmatpush1.msra.mxu0 %v254
        %927 = vmatprep.subr.mxu0 %v261
        %928 = vmatpush1.msra.mxu0 %v260
        %929 = vmatprep.subr.mxu0 %v267
        %930 = vmatpush1.msra.mxu0 %v266
        %931 = vmatprep.subr.mxu0 %v273
        %932 = vmatpush1.msra.mxu0 %v272
        %933 = vmatprep.subr.mxu0 %v279
        %934 = vmatpush1.msra.mxu0 %v278
        %935 = vmatprep.subr.mxu0 %v285
        %936 = vmatpush1.msra.mxu0 %v284
        %937 = vmatprep.subr.mxu0 %v291
        %938 = vmatpush1.msra.mxu0 %v290
        %939 = vmatprep.subr.mxu0 %v297
        %940 = vmatpush1.msra.mxu0 %v296
        %941 = vmatprep.subr.mxu0 %v303
        %942 = vmatpush1.msra.mxu0 %v302
        %943 = vmatprep.subr.mxu0 %v309
        %944 = vmatpush1.msra.mxu0 %v308
        %945 = vmatprep.subr.mxu0 %v315
        %946 = vmatpush1.msra.mxu0 %v314
        %947 = vmatprep.subr.mxu0 %v321
        %948 = vmatpush1.msra.mxu0 %v320
        %949 = vmatprep.subr.mxu0 %v327
        %950 = vmatpush1.msra.mxu0 %v326
        %951 = vmatprep.subr.mxu0 %v333
        %952 = vmatpush1.msra.mxu0 %v332
        %953 = vmatprep.subr.mxu0 %v339
        %954 = vmatpush1.msra.mxu0 %v338
        %955 = vmatprep.subr.mxu0 %v345
        %956 = vmatpush1.msra.mxu0 %v344
        %957 = vmatprep.subr.mxu0 %v351
        %958 = vmatpush1.msra.mxu0 %v350
        %959 = vmatprep.subr.mxu0 %v357
        %960 = vmatpush1.msra.mxu0 %v356
        %961 = vmatprep.subr.mxu0 %v363
        %962 = vmatpush1.msra.mxu0 %v362
        %963 = vmatprep.mubr.f32.mxu0 %v170
        %964 = vmatmul.mubr.f32.gmra.mrb[0].mxu0 %v169
        %v965 = vpop.f32.mrb[0].mxu0
        %v966 = vadd.f32 %v667, %v965
        %v967 = vpop.f32.mrb[0].mxu0
        %v968 = vadd.f32 %v671, %v967
        %969 = vdwg.mxu0
        %970 = vmatprep.subr.mxu0 %v369
        %971 = vmatpush1.msra.mxu0 %v368
        %972 = vmatprep.subr.mxu0 %v375
        %973 = vmatpush1.msra.mxu0 %v374
        %974 = vmatprep.subr.mxu0 %v381
        %975 = vmatpush1.msra.mxu0 %v380
        %976 = vmatprep.subr.mxu0 %v387
        %977 = vmatpush1.msra.mxu0 %v386
        %978 = vmatprep.subr.mxu0 %v393
        %979 = vmatpush1.msra.mxu0 %v392
        %980 = vmatprep.subr.mxu0 %v399
        %981 = vmatpush1.msra.mxu0 %v398
        %982 = vmatprep.subr.mxu0 %v405
        %983 = vmatpush1.msra.mxu0 %v404
        %984 = vmatprep.subr.mxu0 %v411
        %985 = vmatpush1.msra.mxu0 %v410
        %986 = vmatprep.subr.mxu0 %v417
        %987 = vmatpush1.msra.mxu0 %v416
        %988 = vmatprep.subr.mxu0 %v423
        %989 = vmatpush1.msra.mxu0 %v422
        %990 = vmatprep.subr.mxu0 %v429
        %991 = vmatpush1.msra.mxu0 %v428
        %992 = vmatprep.subr.mxu0 %v435
        %993 = vmatpush1.msra.mxu0 %v434
        %994 = vmatprep.subr.mxu0 %v441
        %995 = vmatpush1.msra.mxu0 %v440
        %996 = vmatprep.subr.mxu0 %v447
        %997 = vmatpush1.msra.mxu0 %v446
        %998 = vmatprep.subr.mxu0 %v453
        %999 = vmatpush1.msra.mxu0 %v452
        %1000 = vmatprep.subr.mxu0 %v459
        %1001 = vmatpush1.msra.mxu0 %v458
        %1002 = vmatprep.subr.mxu0 %v465
        %1003 = vmatpush1.msra.mxu0 %v464
        %1004 = vmatprep.subr.mxu0 %v471
        %1005 = vmatpush1.msra.mxu0 %v470
        %1006 = vmatprep.subr.mxu0 %v477
        %1007 = vmatpush1.msra.mxu0 %v476
        %1008 = vmatprep.subr.mxu0 %v483
        %1009 = vmatpush1.msra.mxu0 %v482
        %1010 = vmatprep.subr.mxu0 %v489
        %1011 = vmatpush1.msra.mxu0 %v488
        %1012 = vmatprep.subr.mxu0 %v495
        %1013 = vmatpush1.msra.mxu0 %v494
        %1014 = vmatprep.subr.mxu0 %v501
        %1015 = vmatpush1.msra.mxu0 %v500
        %1016 = vmatprep.subr.mxu0 %v507
        %1017 = vmatpush1.msra.mxu0 %v506
        %1018 = vmatprep.subr.mxu0 %v513
        %1019 = vmatpush1.msra.mxu0 %v512
        %1020 = vmatprep.subr.mxu0 %v519
        %1021 = vmatpush1.msra.mxu0 %v518
        %1022 = vmatprep.subr.mxu0 %v525
        %1023 = vmatpush1.msra.mxu0 %v524
        %1024 = vmatprep.subr.mxu0 %v531
        %1025 = vmatpush1.msra.mxu0 %v530
        %1026 = vmatprep.subr.mxu0 %v537
        %1027 = vmatpush1.msra.mxu0 %v536
        %1028 = vmatprep.subr.mxu0 %v543
        %1029 = vmatpush1.msra.mxu0 %v542
        %1030 = vmatprep.subr.mxu0 %v549
        %1031 = vmatpush1.msra.mxu0 %v548
        %1032 = vmatprep.subr.mxu0 %v555
        %1033 = vmatpush1.msra.mxu0 %v554
        %1034 = vmatprep.mubr.f32.mxu0 %v172
        %1035 = vmatmul.mubr.f32.gmra.mrb[0].mxu0 %v171
        %v1036 = vpop.f32.mrb[0].mxu0
        %v1037 = vadd.f32 %v966, %v1036
        %v1038 = vpop.f32.mrb[0].mxu0
        %v1039 = vadd.f32 %v968, %v1038
        %1040 = vdwg.mxu0
        %1041 = vmatprep.subr.mxu0 %v561
        %1042 = vmatpush1.msra.mxu0 %v560
        %1043 = vmatprep.subr.mxu0 %v567
        %1044 = vmatpush1.msra.mxu0 %v566
        %1045 = vmatprep.subr.mxu0 %v573
        %1046 = vmatpush1.msra.mxu0 %v572
        %1047 = vmatprep.subr.mxu0 %v579
        %1048 = vmatpush1.msra.mxu0 %v578
        %1049 = vmatprep.subr.mxu0 %v585
        %1050 = vmatpush1.msra.mxu0 %v584
        %1051 = vmatprep.subr.mxu0 %v591
        %1052 = vmatpush1.msra.mxu0 %v590
        %1053 = vmatprep.subr.mxu0 %v597
        %1054 = vmatpush1.msra.mxu0 %v596
        %1055 = vmatprep.subr.mxu0 %v603
        %1056 = vmatpush1.msra.mxu0 %v602
        %1057 = vmatprep.subr.mxu0 %v609
        %1058 = vmatpush1.msra.mxu0 %v608
        %1059 = vmatprep.subr.mxu0 %v615
        %1060 = vmatpush1.msra.mxu0 %v614
        %1061 = vmatprep.subr.mxu0 %v621
        %1062 = vmatpush1.msra.mxu0 %v620
        %1063 = vmatprep.subr.mxu0 %v627
        %1064 = vmatpush1.msra.mxu0 %v626
        %1065 = vmatprep.subr.mxu0 %v633
        %1066 = vmatpush1.msra.mxu0 %v632
        %1067 = vmatprep.subr.mxu0 %v639
        %1068 = vmatpush1.msra.mxu0 %v638
        %1069 = vmatprep.subr.mxu0 %v645
        %1070 = vmatpush1.msra.mxu0 %v644
        %1071 = vmatprep.subr.mxu0 %v651
        %1072 = vmatpush1.msra.mxu0 %v650
        %1073 = vmatprep.subr.mxu0 0.0
        %1074 = vmatpush1.msra.mxu0 0.0
        %1075 = vmatprep.subr.mxu0 0.0
        %1076 = vmatpush1.msra.mxu0 0.0
        %1077 = vmatprep.subr.mxu0 0.0
        %1078 = vmatpush1.msra.mxu0 0.0
        %1079 = vmatprep.subr.mxu0 0.0
        %1080 = vmatpush1.msra.mxu0 0.0
        %1081 = vmatprep.subr.mxu0 0.0
        %1082 = vmatpush1.msra.mxu0 0.0
        %1083 = vmatprep.subr.mxu0 0.0
        %1084 = vmatpush1.msra.mxu0 0.0
        %1085 = vmatprep.subr.mxu0 0.0
        %1086 = vmatpush1.msra.mxu0 0.0
        %1087 = vmatprep.subr.mxu0 0.0
        %1088 = vmatpush1.msra.mxu0 0.0
        %1089 = vmatprep.subr.mxu0 0.0
        %1090 = vmatpush1.msra.mxu0 0.0
        %1091 = vmatprep.subr.mxu0 0.0
        %1092 = vmatpush1.msra.mxu0 0.0
        %1093 = vmatprep.subr.mxu0 0.0
        %1094 = vmatpush1.msra.mxu0 0.0
        %1095 = vmatprep.subr.mxu0 0.0
        %1096 = vmatpush1.msra.mxu0 0.0
        %1097 = vmatprep.subr.mxu0 0.0
        %1098 = vmatpush1.msra.mxu0 0.0
        %1099 = vmatprep.subr.mxu0 0.0
        %1100 = vmatpush1.msra.mxu0 0.0
        %1101 = vmatprep.subr.mxu0 0.0
        %1102 = vmatpush1.msra.mxu0 0.0
        %1103 = vmatprep.subr.mxu0 0.0
        %1104 = vmatpush1.msra.mxu0 0.0
        %1105 = vmatprep.mubr.f32.mxu0 0.0
        %1106 = vmatmul.mubr.f32.gmra.mrb[0].mxu0 %v173
        %v1107 = vpop.f32.mrb[0].mxu0
        %v1108 = vadd.f32 %v1037, %v1107
        %v1109 = vpop.f32.mrb[0].mxu0
        %v1110 = vadd.f32 %v1039, %v1109
        %1111 = vdwg.mxu0
        %1112 = vmatprep.subr.mxu0 %v179
        %1113 = vmatpush1.msra.mxu0 %v178
        %1114 = vmatprep.subr.mxu0 %v185
        %1115 = vmatpush1.msra.mxu0 %v184
        %1116 = vmatprep.subr.mxu0 %v191
        %1117 = vmatpush1.msra.mxu0 %v190
        %1118 = vmatprep.subr.mxu0 %v197
        %1119 = vmatpush1.msra.mxu0 %v196
        %1120 = vmatprep.subr.mxu0 %v203
        %1121 = vmatpush1.msra.mxu0 %v202
        %1122 = vmatprep.subr.mxu0 %v209
        %1123 = vmatpush1.msra.mxu0 %v208
        %1124 = vmatprep.subr.mxu0 %v215
        %1125 = vmatpush1.msra.mxu0 %v214
        %1126 = vmatprep.subr.mxu0 %v221
        %1127 = vmatpush1.msra.mxu0 %v220
        %1128 = vmatprep.subr.mxu0 %v227
        %1129 = vmatpush1.msra.mxu0 %v226
        %1130 = vmatprep.subr.mxu0 %v233
        %1131 = vmatpush1.msra.mxu0 %v232
        %1132 = vmatprep.subr.mxu0 %v239
        %1133 = vmatpush1.msra.mxu0 %v238
        %1134 = vmatprep.subr.mxu0 %v245
        %1135 = vmatpush1.msra.mxu0 %v244
        %1136 = vmatprep.subr.mxu0 %v251
        %1137 = vmatpush1.msra.mxu0 %v250
        %1138 = vmatprep.subr.mxu0 %v257
        %1139 = vmatpush1.msra.mxu0 %v256
        %1140 = vmatprep.subr.mxu0 %v263
        %1141 = vmatpush1.msra.mxu0 %v262
        %1142 = vmatprep.subr.mxu0 %v269
        %1143 = vmatpush1.msra.mxu0 %v268
        %1144 = vmatprep.subr.mxu0 %v275
        %1145 = vmatpush1.msra.mxu0 %v274
        %1146 = vmatprep.subr.mxu0 %v281
        %1147 = vmatpush1.msra.mxu0 %v280
        %1148 = vmatprep.subr.mxu0 %v287
        %1149 = vmatpush1.msra.mxu0 %v286
        %1150 = vmatprep.subr.mxu0 %v293
        %1151 = vmatpush1.msra.mxu0 %v292
        %1152 = vmatprep.subr.mxu0 %v299
        %1153 = vmatpush1.msra.mxu0 %v298
        %1154 = vmatprep.subr.mxu0 %v305
        %1155 = vmatpush1.msra.mxu0 %v304
        %1156 = vmatprep.subr.mxu0 %v311
        %1157 = vmatpush1.msra.mxu0 %v310
        %1158 = vmatprep.subr.mxu0 %v317
        %1159 = vmatpush1.msra.mxu0 %v316
        %1160 = vmatprep.subr.mxu0 %v323
        %1161 = vmatpush1.msra.mxu0 %v322
        %1162 = vmatprep.subr.mxu0 %v329
        %1163 = vmatpush1.msra.mxu0 %v328
        %1164 = vmatprep.subr.mxu0 %v335
        %1165 = vmatpush1.msra.mxu0 %v334
        %1166 = vmatprep.subr.mxu0 %v341
        %1167 = vmatpush1.msra.mxu0 %v340
        %1168 = vmatprep.subr.mxu0 %v347
        %1169 = vmatpush1.msra.mxu0 %v346
        %1170 = vmatprep.subr.mxu0 %v353
        %1171 = vmatpush1.msra.mxu0 %v352
        %1172 = vmatprep.subr.mxu0 %v359
        %1173 = vmatpush1.msra.mxu0 %v358
        %1174 = vmatprep.subr.mxu0 %v365
        %1175 = vmatpush1.msra.mxu0 %v364
        %1176 = vmatprep.mubr.f32.mxu0 %v170
        %1177 = vmatmul.mubr.f32.gmra.mrb[0].mxu0 %v169
        %v1178 = vpop.f32.mrb[0].mxu0
        %v1179 = vadd.f32 %v675, %v1178
        %v1180 = vpop.f32.mrb[0].mxu0
        %v1181 = vadd.f32 %v679, %v1180
        %1182 = vdwg.mxu0
        %1183 = vmatprep.subr.mxu0 %v371
        %1184 = vmatpush1.msra.mxu0 %v370
        %1185 = vmatprep.subr.mxu0 %v377
        %1186 = vmatpush1.msra.mxu0 %v376
        %1187 = vmatprep.subr.mxu0 %v383
        %1188 = vmatpush1.msra.mxu0 %v382
        %1189 = vmatprep.subr.mxu0 %v389
        %1190 = vmatpush1.msra.mxu0 %v388
        %1191 = vmatprep.subr.mxu0 %v395
        %1192 = vmatpush1.msra.mxu0 %v394
        %1193 = vmatprep.subr.mxu0 %v401
        %1194 = vmatpush1.msra.mxu0 %v400
        %1195 = vmatprep.subr.mxu0 %v407
        %1196 = vmatpush1.msra.mxu0 %v406
        %1197 = vmatprep.subr.mxu0 %v413
        %1198 = vmatpush1.msra.mxu0 %v412
        %1199 = vmatprep.subr.mxu0 %v419
        %1200 = vmatpush1.msra.mxu0 %v418
        %1201 = vmatprep.subr.mxu0 %v425
        %1202 = vmatpush1.msra.mxu0 %v424
        %1203 = vmatprep.subr.mxu0 %v431
        %1204 = vmatpush1.msra.mxu0 %v430
        %1205 = vmatprep.subr.mxu0 %v437
        %1206 = vmatpush1.msra.mxu0 %v436
        %1207 = vmatprep.subr.mxu0 %v443
        %1208 = vmatpush1.msra.mxu0 %v442
        %1209 = vmatprep.subr.mxu0 %v449
        %1210 = vmatpush1.msra.mxu0 %v448
        %1211 = vmatprep.subr.mxu0 %v455
        %1212 = vmatpush1.msra.mxu0 %v454
        %1213 = vmatprep.subr.mxu0 %v461
        %1214 = vmatpush1.msra.mxu0 %v460
        %1215 = vmatprep.subr.mxu0 %v467
        %1216 = vmatpush1.msra.mxu0 %v466
        %1217 = vmatprep.subr.mxu0 %v473
        %1218 = vmatpush1.msra.mxu0 %v472
        %1219 = vmatprep.subr.mxu0 %v479
        %1220 = vmatpush1.msra.mxu0 %v478
        %1221 = vmatprep.subr.mxu0 %v485
        %1222 = vmatpush1.msra.mxu0 %v484
        %1223 = vmatprep.subr.mxu0 %v491
        %1224 = vmatpush1.msra.mxu0 %v490
        %1225 = vmatprep.subr.mxu0 %v497
        %1226 = vmatpush1.msra.mxu0 %v496
        %1227 = vmatprep.subr.mxu0 %v503
        %1228 = vmatpush1.msra.mxu0 %v502
        %1229 = vmatprep.subr.mxu0 %v509
        %1230 = vmatpush1.msra.mxu0 %v508
        %1231 = vmatprep.subr.mxu0 %v515
        %1232 = vmatpush1.msra.mxu0 %v514
        %1233 = vmatprep.subr.mxu0 %v521
        %1234 = vmatpush1.msra.mxu0 %v520
        %1235 = vmatprep.subr.mxu0 %v527
        %1236 = vmatpush1.msra.mxu0 %v526
        %1237 = vmatprep.subr.mxu0 %v533
        %1238 = vmatpush1.msra.mxu0 %v532
        %1239 = vmatprep.subr.mxu0 %v539
        %1240 = vmatpush1.msra.mxu0 %v538
        %1241 = vmatprep.subr.mxu0 %v545
        %1242 = vmatpush1.msra.mxu0 %v544
        %1243 = vmatprep.subr.mxu0 %v551
        %1244 = vmatpush1.msra.mxu0 %v550
        %1245 = vmatprep.subr.mxu0 %v557
        %1246 = vmatpush1.msra.mxu0 %v556
        %1247 = vmatprep.mubr.f32.mxu0 %v172
        %1248 = vmatmul.mubr.f32.gmra.mrb[0].mxu0 %v171
        %v1249 = vpop.f32.mrb[0].mxu0
        %v1250 = vadd.f32 %v1179, %v1249
        %v1251 = vpop.f32.mrb[0].mxu0
        %v1252 = vadd.f32 %v1181, %v1251
        %1253 = vdwg.mxu0
        %1254 = vmatprep.subr.mxu0 %v563
        %1255 = vmatpush1.msra.mxu0 %v562
        %1256 = vmatprep.subr.mxu0 %v569
        %1257 = vmatpush1.msra.mxu0 %v568
        %1258 = vmatprep.subr.mxu0 %v575
        %1259 = vmatpush1.msra.mxu0 %v574
        %1260 = vmatprep.subr.mxu0 %v581
        %1261 = vmatpush1.msra.mxu0 %v580
        %1262 = vmatprep.subr.mxu0 %v587
        %1263 = vmatpush1.msra.mxu0 %v586
        %1264 = vmatprep.subr.mxu0 %v593
        %1265 = vmatpush1.msra.mxu0 %v592
        %1266 = vmatprep.subr.mxu0 %v599
        %1267 = vmatpush1.msra.mxu0 %v598
        %1268 = vmatprep.subr.mxu0 %v605
        %1269 = vmatpush1.msra.mxu0 %v604
        %1270 = vmatprep.subr.mxu0 %v611
        %1271 = vmatpush1.msra.mxu0 %v610
        %1272 = vmatprep.subr.mxu0 %v617
        %1273 = vmatpush1.msra.mxu0 %v616
        %1274 = vmatprep.subr.mxu0 %v623
        %1275 = vmatpush1.msra.mxu0 %v622
        %1276 = vmatprep.subr.mxu0 %v629
        %1277 = vmatpush1.msra.mxu0 %v628
        %1278 = vmatprep.subr.mxu0 %v635
        %1279 = vmatpush1.msra.mxu0 %v634
        %1280 = vmatprep.subr.mxu0 %v641
        %1281 = vmatpush1.msra.mxu0 %v640
        %1282 = vmatprep.subr.mxu0 %v647
        %1283 = vmatpush1.msra.mxu0 %v646
        %1284 = vmatprep.subr.mxu0 %v653
        %1285 = vmatpush1.msra.mxu0 %v652
        %1286 = vmatprep.subr.mxu0 0.0
        %1287 = vmatpush1.msra.mxu0 0.0
        %1288 = vmatprep.subr.mxu0 0.0
        %1289 = vmatpush1.msra.mxu0 0.0
        %1290 = vmatprep.subr.mxu0 0.0
        %1291 = vmatpush1.msra.mxu0 0.0
        %1292 = vmatprep.subr.mxu0 0.0
        %1293 = vmatpush1.msra.mxu0 0.0
        %1294 = vmatprep.subr.mxu0 0.0
        %1295 = vmatpush1.msra.mxu0 0.0
        %1296 = vmatprep.subr.mxu0 0.0
        %1297 = vmatpush1.msra.mxu0 0.0
        %1298 = vmatprep.subr.mxu0 0.0
        %1299 = vmatpush1.msra.mxu0 0.0
        %1300 = vmatprep.subr.mxu0 0.0
        %1301 = vmatpush1.msra.mxu0 0.0
        %1302 = vmatprep.subr.mxu0 0.0
        %1303 = vmatpush1.msra.mxu0 0.0
        %1304 = vmatprep.subr.mxu0 0.0
        %1305 = vmatpush1.msra.mxu0 0.0
        %1306 = vmatprep.subr.mxu0 0.0
        %1307 = vmatpush1.msra.mxu0 0.0
        %1308 = vmatprep.subr.mxu0 0.0
        %1309 = vmatpush1.msra.mxu0 0.0
        %1310 = vmatprep.subr.mxu0 0.0
        %1311 = vmatpush1.msra.mxu0 0.0
        %1312 = vmatprep.subr.mxu0 0.0
        %1313 = vmatpush1.msra.mxu0 0.0
        %1314 = vmatprep.subr.mxu0 0.0
        %1315 = vmatpush1.msra.mxu0 0.0
        %1316 = vmatprep.subr.mxu0 0.0
        %1317 = vmatpush1.msra.mxu0 0.0
        %1318 = vmatprep.mubr.f32.mxu0 0.0
        %1319 = vmatmul.mubr.f32.gmra.mrb[0].mxu0 %v173
        %v1320 = vpop.f32.mrb[0].mxu0
        %v1321 = vadd.f32 %v1250, %v1320
        %v1322 = vpop.f32.mrb[0].mxu0
        %v1323 = vadd.f32 %v1252, %v1322
        %1324 = vdwg.mxu0
        %1325 = vst [vmem:[%s163] sm:$0xff] %v895
        %1326 = vst [vmem:[%s163 + $0x8] sm:$0xff] %v897
        %1327 = vst [vmem:[%s163 + $0x10] sm:$0xff] %v1108
        %1328 = vst [vmem:[%s163 + $0x18] sm:$0xff] %v1110
        %1329 = vst [vmem:[%s163 + $0x20] sm:$0xff] %v1321
        %vm1330 = vcmask 236544
        %1331 = vst.msk [vmem:[%s163 + $0x28] sm:$0xff] %vm1330, %v1323
        %s1332 = sand.u32 %s93, 1
        %s1333 = scalar_lea.sflag [#allocation3], %s1332
        %s1334 = sand.u32 %s93, 1
        %s1335 = smul.addr %s1334, 48
        %s1336 = scalar_lea.vmem [#allocation2], %s1335
        // Predicated region
        $region33: #{single_pose_decode.1} parent=31 // pred_check
          %p1337 = pneg %p103
        $region34: #{single_pose_decode.1} parent=31 // pred_check_branch
          %1339 = sbr.rel (%p1337) target = $region36
        $region35: #{single_pose_decode.1} parent=31 // pred_region
          %s1341 = ssub.s32 768, 768
          %1342 = vsyncadd %s1333, %s1341
          %s1343 = smul.addr %s17, 6
          %s1344 = smul.addr %s1343, 128
          %s1345 = scalar_lea.hbm %s3, %s1344
          %s1347 = sshll.u32 %s1336, 4
          %s1348 = int_to_ptr.vmem [resolvable:$true] %s1347
          %1350 = dma.vmem_to_hbm [thread:$0]  %s1348, 768, %s1345, %s1333
        $region36: #{single_pose_decode.1} parent=31 // pred_fallthru
          _
      $region32: #{single_pose_decode.1} parent=5 // pred_fallthru
        _
      %p1351 = scmp.le.s32.totalorder 2, %s12
      // Predicated region
      $region37: #{single_pose_decode.1} parent=5 // pred_check
        %p1352 = pneg %p1351
      $region38: #{single_pose_decode.1} parent=5 // pred_check_branch
        %1354 = sbr.rel (%p1352) target = $region40
      $region39: #{single_pose_decode.1} parent=5 // pred_region
        %s1355 = ssub.s32 %s12, 2
        // Predicated region
        $region41: #{single_pose_decode.1} parent=39 // pred_check
          %p1356 = pneg %p109
        $region42: #{single_pose_decode.1} parent=39 // pred_check_branch
          %1358 = sbr.rel (%p1356) target = $region44
        $region43: #{single_pose_decode.1} parent=39 // pred_region
          %s1359 = sand.u32 %s94, 1
          %s1360 = scalar_lea.sflag [#allocation3], %s1359
          %s1361 = sand.u32 %s94, 1
          %s1362 = smul.addr %s1361, 48
          %s1363 = scalar_lea.vmem [#allocation2], %s1362
          %1364 = dma.done %s1360, 768
        $region44: #{single_pose_decode.1} parent=39 // pred_fallthru
          _
      $region40: #{single_pose_decode.1} parent=5 // pred_fallthru
        _
    $region6: #{single_pose_decode.1} parent=1 // loop_footer
      %s16 = sadd.s32 1, %s12
    $region7: #{single_pose_decode.1} parent=1 // loop_footer_branch
      %11 = sbr.rel target = $region3
    $region8: #{single_pose_decode.1} parent=1 // loop_exit
      _
    %1365 = vsyncpa [#allocation3], 1
    %s1366 = scalar_lea.sflag [#allocation3], 1
    %1367 = vsyncpa %s1366, 1

</llo_original>
